<compile_context>
chip_gen: v5e
topology: v5e:2x2
jax: 0.10.0
libtpu: 0.0.40
codegen_flags: <defaults>
</compile_context>

<pallas_src>
import numpy as np
import jax
import jax.numpy as jnp
from jax.experimental import pallas as pl
from jax.experimental.pallas import tpu as pltpu

H = W = 15          # spatial size implied by input_spatial_size([1, 1])
C_IN = 200          # scn.SubmanifoldConvolution in-planes
C1 = 16             # first conv out-planes
C2 = 32             # second conv out-planes
N_CLS = 2           # nn.Linear(32, 2)

PAD = H + 2                     # 17: zero-padded spatial extent for the 3x3 "same" conv
NPP = PAD * PAD                 # 289: flattened padded positions (lane dim)
L1 = 14 * PAD + 14 + 1          # 253: flat width covering every valid conv1 output (i,j<=14)
LP = 34 * 6 + 2 * 6 + 1         # 217: flat width covering every pool1 window base (34*pi+2*pj)
NP1 = 7 * 7                     # 49 pooled positions after pool1
L2 = 2 * 7 + 2 + 1              # 17: flat width covering every valid conv2 output (oi,oj<=2)

# Flat lane offsets of the conv / pool window taps (row stride = padded width).
CONV1_OFF = [17 * ty + tx for ty in range(3) for tx in range(3)]   # also pool1 offsets
CONV2_OFF = [7 * dy + dx for dy in range(5) for dx in range(5)]

# 0/1 matrix picking the 49 stride-2 pooled lanes (base = 34*pi + 2*pj) out of LP bases.
_SEL = np.zeros((LP, NP1), np.float32)
for _pi in range(7):
    for _pj in range(7):
        _SEL[34 * _pi + 2 * _pj, 7 * _pi + _pj] = 1.0


def _make_kernel(S):
    """Kernel processing S samples per grid step."""

    def kernel(x_ref, w1_ref, b1_ref, sel_ref, w2_ref, wl_ref, bl_ref, o_ref):
        # x_ref : (S, 200, 289) bf16   raw padded samples (channels on sublanes)
        # w1_ref: (144, 200)    bf16   conv1 weights, taps folded into M
        # b1_ref: (16, 1)       f32
        # sel_ref:(217, 49)     bf16   0/1 pooled-lane selection matrix
        # w2_ref: (800, 16)     bf16   conv2 weights, taps folded into M
        # wl_ref: (32, 2)       f32    linear weights (in x out)
        # bl_ref: (1, 2)        f32
        # o_ref : (S, 1, 2)     f32    softmax probabilities
        w1m = w1_ref[...]
        b1 = b1_ref[...]
        sel = sel_ref[...]
        w2m = w2_ref[...]
        wl = wl_ref[...]
        bl = bl_ref[...]

        for s in range(S):
            x = x_ref[s]                                                   # (200, 289)

            # --- conv1 (3x3 same, 200 -> 16): one MXU matmul, 9 lane-shifted adds ---
            z1 = jnp.dot(w1m, x, preferred_element_type=jnp.float32)      # (144, 289)
            y1 = z1[0:C1, 0:L1]
            for t in range(1, 9):
                off = CONV1_OFF[t]
                y1 = y1 + z1[C1 * t:C1 * (t + 1), off:off + L1]
            y1 = y1 + b1                                                   # (16, 253)

            # --- maxpool 3x3 / stride 2 (15x15 -> 7x7) ---
            # 9 lane-shifted maxes over the flat map, then a tiny 0/1 selection
            # matmul compacting the 49 stride-2 lanes into (16, 49).
            mm = y1[:, 0:LP]
            for t in range(1, 9):
                off = CONV1_OFF[t]
                mm = jnp.maximum(mm, y1[:, off:off + LP])
            p1 = jnp.dot(mm.astype(jnp.bfloat16), sel,
                         preferred_element_type=jnp.float32)               # (16, 49)

            # --- conv2 (5x5 valid, 16 -> 32, no bias): one matmul + 25 shifted adds ---
            z2 = jnp.dot(w2m, p1.astype(jnp.bfloat16),
                         preferred_element_type=jnp.float32)               # (800, 49)
            y2 = z2[0:C2, 0:L2]
            for t in range(1, 25):
                off = CONV2_OFF[t]
                y2 = y2 + z2[C2 * t:C2 * (t + 1), off:off + L2]            # (32, 17)

            # --- maxpool 3x3 / stride 2 on 3x3 -> 1x1 (max over the 9 valid lanes) ---
            vm = jnp.maximum(jnp.maximum(y2[:, 0:3], y2[:, 7:10]), y2[:, 14:17])
            v = jnp.max(vm, axis=1, keepdims=True)                         # (32, 1)

            # --- SparseToDense + view(-1, 32) + Linear(32, 2) + softmax(dim=1) ---
            logits = jnp.sum(wl * v, axis=0, keepdims=True) + bl           # (1, 2)
            zmax = jnp.max(logits, axis=-1, keepdims=True)
            e = jnp.exp(logits - zmax)
            o_ref[s] = e / jnp.sum(e, axis=-1, keepdims=True)

    return kernel


def _samples_per_step(n):
    """Batch S samples per grid step (amortize per-step overhead); prefer an
    even-length grid so both TensorCores get equal work on v7x."""
    for s in (8, 4, 2, 1):
        if n % s == 0 and (n // s) % 2 == 0:
            return s
    for s in (8, 4, 2, 1):
        if n % s == 0:
            return s
    return 1


def init_params(key):
    """Deterministic, torch-default-like uniform fan-in init."""
    k1, k2, k3, k4, k5 = jax.random.split(key, 5)
    lim1 = 1.0 / (C_IN * 9) ** 0.5
    w1 = jax.random.uniform(k1, (3, 3, C_IN, C1), jnp.float32, -lim1, lim1)
    b1 = jax.random.uniform(k2, (1, C1), jnp.float32, -lim1, lim1)
    lim2 = 1.0 / (C1 * 25) ** 0.5
    w2 = jax.random.uniform(k3, (5, 5, C1, C2), jnp.float32, -lim2, lim2)
    liml = 1.0 / C2 ** 0.5
    wl = jax.random.uniform(k4, (C2, N_CLS), jnp.float32, -liml, liml)
    bl = jax.random.uniform(k5, (1, N_CLS), jnp.float32, -liml, liml)
    return w1, b1, w2, wl, bl


@jax.jit
def sparsenet_forward(x_nchw, params):
    w1, b1, w2, wl, bl = params
    n = x_nchw.shape[0]
    S = _samples_per_step(n)

    # NCHW is already channel-major for our layout: cast to bf16 FIRST (halves
    # wrapper HBM traffic), zero-pad spatially, flatten 17x17 -> 289 lanes.
    # No gather / im2col blow-up: kernel input is ~113 KB per sample.
    xb = x_nchw.astype(jnp.bfloat16)
    xpad = jnp.pad(xb, ((0, 0), (0, 0), (1, 1), (1, 1)))        # (n, 200, 17, 17)
    xflat = xpad.reshape(n, C_IN, NPP)                          # (n, 200, 289)

    # Conv weights with taps folded into the M dimension.
    w1m = jnp.transpose(w1, (0, 1, 3, 2)).reshape(9 * C1, C_IN).astype(jnp.bfloat16)
    w2m = jnp.transpose(w2, (0, 1, 3, 2)).reshape(25 * C2, C1).astype(jnp.bfloat16)
    b1c = b1.reshape(C1, 1)
    sel = jnp.asarray(_SEL, dtype=jnp.bfloat16)
    blr = bl.reshape(1, N_CLS)

    out = pl.pallas_call(
        _make_kernel(S),
        out_shape=jax.ShapeDtypeStruct((n, 1, N_CLS), jnp.float32),
        grid=(n // S,),
        in_specs=[
            pl.BlockSpec((S, C_IN, NPP), lambda i: (i, 0, 0)),   # S samples per step
            pl.BlockSpec((9 * C1, C_IN), lambda i: (0, 0)),      # weights stay resident
            pl.BlockSpec((C1, 1), lambda i: (0, 0)),
            pl.BlockSpec((LP, NP1), lambda i: (0, 0)),
            pl.BlockSpec((25 * C2, C1), lambda i: (0, 0)),
            pl.BlockSpec((C2, N_CLS), lambda i: (0, 0)),
            pl.BlockSpec((1, N_CLS), lambda i: (0, 0)),
        ],
        out_specs=pl.BlockSpec((S, 1, N_CLS), lambda i: (i, 0, 0)),
        compiler_params=pltpu.CompilerParams(
            dimension_semantics=("parallel",)),
    )(xflat, w1m, b1c, sel, w2m, wl, blr)
    return out.reshape(n, N_CLS)


def ref_forward(x_nchw, params):
    """Pure-JAX dense-equivalent reference (mirrors the kernel's bf16 cast points)."""
    w1, b1, w2, wl, bl = params
    n = x_nchw.shape[0]
    x = jnp.transpose(x_nchw, (0, 2, 3, 1)).astype(jnp.bfloat16).astype(jnp.float32)
    xp = jnp.pad(x, ((0, 0), (1, 1), (1, 1), (0, 0)))
    w1f = w1.astype(jnp.bfloat16).astype(jnp.float32)
    y1 = jnp.zeros((n, H, W, C1), jnp.float32)
    for ty in range(3):
        for tx in range(3):
            y1 = y1 + jnp.einsum('nijc,cf->nijf',
                                 xp[:, ty:ty + H, tx:tx + W, :], w1f[ty, tx])
    y1 = y1 + b1.reshape(1, 1, 1, C1)
    p1 = jnp.full((n, 7, 7, C1), -jnp.inf, jnp.float32)
    for ky in range(3):
        for kx in range(3):
            p1 = jnp.maximum(p1, y1[:, ky:ky + 13:2, kx:kx + 13:2, :])
    p1 = p1.astype(jnp.bfloat16).astype(jnp.float32)
    w2f = w2.astype(jnp.bfloat16).astype(jnp.float32)
    y2 = jnp.zeros((n, 3, 3, C2), jnp.float32)
    for dy in range(5):
        for dx in range(5):
            y2 = y2 + jnp.einsum('nijc,cf->nijf',
                                 p1[:, dy:dy + 3, dx:dx + 3, :], w2f[dy, dx])
    v = jnp.max(y2, axis=(1, 2))
    logits = v @ wl + bl
    return jax.nn.softmax(logits, axis=-1)


if __name__ == "__main__":
    key = jax.random.PRNGKey(0)
    kx_, kp = jax.random.split(key)
    params = init_params(kp)

    # batch=2, channels=200, spatial=15x15 (the size the scn model requires)
    x = jax.random.normal(kx_, (2, C_IN, H, W), jnp.float32)

    out = sparsenet_forward(x, params)
    out = jax.block_until_ready(out)

    assert out.shape == (2, N_CLS), out.shape
    assert bool(jnp.allclose(jnp.sum(out, axis=-1), 1.0, atol=1e-5)), out
    ref = ref_forward(x, params)
    assert bool(jnp.allclose(out, ref, atol=2e-2)), (out, ref)
    print("KERNEL_OK")
</pallas_src>

<mosaic_0001>
module attributes {stable_mosaic.version = 11 : i64} {
  func.func @kernel(%arg0: i32, %arg1: memref<1x200x289xbf16, #tpu.memory_space<vmem>>, %arg2: memref<144x200xbf16, #tpu.memory_space<vmem>>, %arg3: memref<16x1xf32, #tpu.memory_space<vmem>>, %arg4: memref<217x49xbf16, #tpu.memory_space<vmem>>, %arg5: memref<800x16xbf16, #tpu.memory_space<vmem>>, %arg6: memref<32x2xf32, #tpu.memory_space<vmem>>, %arg7: memref<1x2xf32, #tpu.memory_space<vmem>>, %arg8: memref<1x1x2xf32, #tpu.memory_space<vmem>>) attributes {dimension_semantics = [#tpu.dimension_semantics<parallel>], iteration_bounds = array<i64: 2>, scalar_prefetch = 0 : i64, scratch_operands = 0 : i64, tpu.core_type = #tpu.core_type<tc>, window_params = [{transform_indices = @transform_0, window_bounds = array<i64: 1, 200, 289>}, {pipeline_mode = #tpu.pipeline_mode<synchronous>, transform_indices = @transform_1, window_bounds = array<i64: 144, 200>}, {pipeline_mode = #tpu.pipeline_mode<synchronous>, transform_indices = @transform_2, window_bounds = array<i64: 16, 1>}, {pipeline_mode = #tpu.pipeline_mode<synchronous>, transform_indices = @transform_3, window_bounds = array<i64: 217, 49>}, {pipeline_mode = #tpu.pipeline_mode<synchronous>, transform_indices = @transform_4, window_bounds = array<i64: 800, 16>}, {pipeline_mode = #tpu.pipeline_mode<synchronous>, transform_indices = @transform_5, window_bounds = array<i64: 32, 2>}, {pipeline_mode = #tpu.pipeline_mode<synchronous>, transform_indices = @transform_6, window_bounds = array<i64: 1, 2>}, {transform_indices = @transform_7, window_bounds = array<i64: 1, 1, 2>}]} {
    %c0 = arith.constant 0 : index
    %c0_0 = arith.constant 0 : index
    %0 = vector.load %arg2[%c0, %c0_0] : memref<144x200xbf16, #tpu.memory_space<vmem>>, vector<144x200xbf16>
    %c0_1 = arith.constant 0 : index
    %c0_2 = arith.constant 0 : index
    %1 = vector.load %arg3[%c0_1, %c0_2] : memref<16x1xf32, #tpu.memory_space<vmem>>, vector<16x1xf32>
    %c0_3 = arith.constant 0 : index
    %c0_4 = arith.constant 0 : index
    %2 = vector.load %arg4[%c0_3, %c0_4] : memref<217x49xbf16, #tpu.memory_space<vmem>>, vector<217x49xbf16>
    %c0_5 = arith.constant 0 : index
    %c0_6 = arith.constant 0 : index
    %3 = vector.load %arg5[%c0_5, %c0_6] : memref<800x16xbf16, #tpu.memory_space<vmem>>, vector<800x16xbf16>
    %c0_7 = arith.constant 0 : index
    %c0_8 = arith.constant 0 : index
    %4 = vector.load %arg6[%c0_7, %c0_8] : memref<32x2xf32, #tpu.memory_space<vmem>>, vector<32x2xf32>
    %c0_9 = arith.constant 0 : index
    %c0_10 = arith.constant 0 : index
    %5 = vector.load %arg7[%c0_9, %c0_10] : memref<1x2xf32, #tpu.memory_space<vmem>>, vector<1x2xf32>
    %c0_11 = arith.constant 0 : index
    %c0_12 = arith.constant 0 : index
    %c0_13 = arith.constant 0 : index
    %6 = vector.load %arg1[%c0_11, %c0_12, %c0_13] : memref<1x200x289xbf16, #tpu.memory_space<vmem>>, vector<1x200x289xbf16>
    %7 = vector.shape_cast %6 : vector<1x200x289xbf16> to vector<200x289xbf16>
    %cst = arith.constant dense<0.000000e+00> : vector<144x289xf32>
    %8 = tpu.matmul %0, %7, %cst {dimension_numbers = #tpu.dot_dimension_numbers<[1], [0], [0], [1], [0, 0, 1, 1], [], []>} : vector<144x200xbf16>, vector<200x289xbf16>, vector<144x289xf32> -> vector<144x289xf32>
    %9 = vector.extract_strided_slice %8 {offsets = [0, 0], sizes = [16, 253], strides = [1, 1]} : vector<144x289xf32> to vector<16x253xf32>
    %10 = vector.extract_strided_slice %8 {offsets = [16, 1], sizes = [16, 253], strides = [1, 1]} : vector<144x289xf32> to vector<16x253xf32>
    %11 = arith.addf %9, %10 : vector<16x253xf32>
    %12 = vector.extract_strided_slice %8 {offsets = [32, 2], sizes = [16, 253], strides = [1, 1]} : vector<144x289xf32> to vector<16x253xf32>
    %13 = arith.addf %11, %12 : vector<16x253xf32>
    %14 = vector.extract_strided_slice %8 {offsets = [48, 17], sizes = [16, 253], strides = [1, 1]} : vector<144x289xf32> to vector<16x253xf32>
    %15 = arith.addf %13, %14 : vector<16x253xf32>
    %16 = vector.extract_strided_slice %8 {offsets = [64, 18], sizes = [16, 253], strides = [1, 1]} : vector<144x289xf32> to vector<16x253xf32>
    %17 = arith.addf %15, %16 : vector<16x253xf32>
    %18 = vector.extract_strided_slice %8 {offsets = [80, 19], sizes = [16, 253], strides = [1, 1]} : vector<144x289xf32> to vector<16x253xf32>
    %19 = arith.addf %17, %18 : vector<16x253xf32>
    %20 = vector.extract_strided_slice %8 {offsets = [96, 34], sizes = [16, 253], strides = [1, 1]} : vector<144x289xf32> to vector<16x253xf32>
    %21 = arith.addf %19, %20 : vector<16x253xf32>
    %22 = vector.extract_strided_slice %8 {offsets = [112, 35], sizes = [16, 253], strides = [1, 1]} : vector<144x289xf32> to vector<16x253xf32>
    %23 = arith.addf %21, %22 : vector<16x253xf32>
    %24 = vector.extract_strided_slice %8 {offsets = [128, 36], sizes = [16, 253], strides = [1, 1]} : vector<144x289xf32> to vector<16x253xf32>
    %25 = arith.addf %23, %24 : vector<16x253xf32>
    %26 = vector.broadcast %1 : vector<16x1xf32> to vector<16x253xf32>
    %27 = arith.addf %25, %26 : vector<16x253xf32>
    %28 = vector.extract_strided_slice %27 {offsets = [0, 0], sizes = [16, 217], strides = [1, 1]} : vector<16x253xf32> to vector<16x217xf32>
    %29 = vector.extract_strided_slice %27 {offsets = [0, 1], sizes = [16, 217], strides = [1, 1]} : vector<16x253xf32> to vector<16x217xf32>
    %30 = arith.maximumf %28, %29 : vector<16x217xf32>
    %31 = vector.extract_strided_slice %27 {offsets = [0, 2], sizes = [16, 217], strides = [1, 1]} : vector<16x253xf32> to vector<16x217xf32>
    %32 = arith.maximumf %30, %31 : vector<16x217xf32>
    %33 = vector.extract_strided_slice %27 {offsets = [0, 17], sizes = [16, 217], strides = [1, 1]} : vector<16x253xf32> to vector<16x217xf32>
    %34 = arith.maximumf %32, %33 : vector<16x217xf32>
    %35 = vector.extract_strided_slice %27 {offsets = [0, 18], sizes = [16, 217], strides = [1, 1]} : vector<16x253xf32> to vector<16x217xf32>
    %36 = arith.maximumf %34, %35 : vector<16x217xf32>
    %37 = vector.extract_strided_slice %27 {offsets = [0, 19], sizes = [16, 217], strides = [1, 1]} : vector<16x253xf32> to vector<16x217xf32>
    %38 = arith.maximumf %36, %37 : vector<16x217xf32>
    %39 = vector.extract_strided_slice %27 {offsets = [0, 34], sizes = [16, 217], strides = [1, 1]} : vector<16x253xf32> to vector<16x217xf32>
    %40 = arith.maximumf %38, %39 : vector<16x217xf32>
    %41 = vector.extract_strided_slice %27 {offsets = [0, 35], sizes = [16, 217], strides = [1, 1]} : vector<16x253xf32> to vector<16x217xf32>
    %42 = arith.maximumf %40, %41 : vector<16x217xf32>
    %43 = vector.extract_strided_slice %27 {offsets = [0, 36], sizes = [16, 217], strides = [1, 1]} : vector<16x253xf32> to vector<16x217xf32>
    %44 = arith.maximumf %42, %43 : vector<16x217xf32>
    %45 = arith.truncf %44 : vector<16x217xf32> to vector<16x217xbf16>
    %cst_14 = arith.constant dense<0.000000e+00> : vector<16x49xf32>
    %46 = tpu.matmul %45, %2, %cst_14 {dimension_numbers = #tpu.dot_dimension_numbers<[1], [0], [0], [1], [0, 0, 1, 1], [], []>} : vector<16x217xbf16>, vector<217x49xbf16>, vector<16x49xf32> -> vector<16x49xf32>
    %47 = arith.truncf %46 : vector<16x49xf32> to vector<16x49xbf16>
    %cst_15 = arith.constant dense<0.000000e+00> : vector<800x49xf32>
    %48 = tpu.matmul %3, %47, %cst_15 {dimension_numbers = #tpu.dot_dimension_numbers<[1], [0], [0], [1], [0, 0, 1, 1], [], []>} : vector<800x16xbf16>, vector<16x49xbf16>, vector<800x49xf32> -> vector<800x49xf32>
    %49 = vector.extract_strided_slice %48 {offsets = [0, 0], sizes = [32, 17], strides = [1, 1]} : vector<800x49xf32> to vector<32x17xf32>
    %50 = vector.extract_strided_slice %48 {offsets = [32, 1], sizes = [32, 17], strides = [1, 1]} : vector<800x49xf32> to vector<32x17xf32>
    %51 = arith.addf %49, %50 : vector<32x17xf32>
    %52 = vector.extract_strided_slice %48 {offsets = [64, 2], sizes = [32, 17], strides = [1, 1]} : vector<800x49xf32> to vector<32x17xf32>
    %53 = arith.addf %51, %52 : vector<32x17xf32>
    %54 = vector.extract_strided_slice %48 {offsets = [96, 3], sizes = [32, 17], strides = [1, 1]} : vector<800x49xf32> to vector<32x17xf32>
    %55 = arith.addf %53, %54 : vector<32x17xf32>
    %56 = vector.extract_strided_slice %48 {offsets = [128, 4], sizes = [32, 17], strides = [1, 1]} : vector<800x49xf32> to vector<32x17xf32>
    %57 = arith.addf %55, %56 : vector<32x17xf32>
    %58 = vector.extract_strided_slice %48 {offsets = [160, 7], sizes = [32, 17], strides = [1, 1]} : vector<800x49xf32> to vector<32x17xf32>
    %59 = arith.addf %57, %58 : vector<32x17xf32>
    %60 = vector.extract_strided_slice %48 {offsets = [192, 8], sizes = [32, 17], strides = [1, 1]} : vector<800x49xf32> to vector<32x17xf32>
    %61 = arith.addf %59, %60 : vector<32x17xf32>
    %62 = vector.extract_strided_slice %48 {offsets = [224, 9], sizes = [32, 17], strides = [1, 1]} : vector<800x49xf32> to vector<32x17xf32>
    %63 = arith.addf %61, %62 : vector<32x17xf32>
    %64 = vector.extract_strided_slice %48 {offsets = [256, 10], sizes = [32, 17], strides = [1, 1]} : vector<800x49xf32> to vector<32x17xf32>
    %65 = arith.addf %63, %64 : vector<32x17xf32>
    %66 = vector.extract_strided_slice %48 {offsets = [288, 11], sizes = [32, 17], strides = [1, 1]} : vector<800x49xf32> to vector<32x17xf32>
    %67 = arith.addf %65, %66 : vector<32x17xf32>
    %68 = vector.extract_strided_slice %48 {offsets = [320, 14], sizes = [32, 17], strides = [1, 1]} : vector<800x49xf32> to vector<32x17xf32>
    %69 = arith.addf %67, %68 : vector<32x17xf32>
    %70 = vector.extract_strided_slice %48 {offsets = [352, 15], sizes = [32, 17], strides = [1, 1]} : vector<800x49xf32> to vector<32x17xf32>
    %71 = arith.addf %69, %70 : vector<32x17xf32>
    %72 = vector.extract_strided_slice %48 {offsets = [384, 16], sizes = [32, 17], strides = [1, 1]} : vector<800x49xf32> to vector<32x17xf32>
    %73 = arith.addf %71, %72 : vector<32x17xf32>
    %74 = vector.extract_strided_slice %48 {offsets = [416, 17], sizes = [32, 17], strides = [1, 1]} : vector<800x49xf32> to vector<32x17xf32>
    %75 = arith.addf %73, %74 : vector<32x17xf32>
    %76 = vector.extract_strided_slice %48 {offsets = [448, 18], sizes = [32, 17], strides = [1, 1]} : vector<800x49xf32> to vector<32x17xf32>
    %77 = arith.addf %75, %76 : vector<32x17xf32>
    %78 = vector.extract_strided_slice %48 {offsets = [480, 21], sizes = [32, 17], strides = [1, 1]} : vector<800x49xf32> to vector<32x17xf32>
    %79 = arith.addf %77, %78 : vector<32x17xf32>
    %80 = vector.extract_strided_slice %48 {offsets = [512, 22], sizes = [32, 17], strides = [1, 1]} : vector<800x49xf32> to vector<32x17xf32>
    %81 = arith.addf %79, %80 : vector<32x17xf32>
    %82 = vector.extract_strided_slice %48 {offsets = [544, 23], sizes = [32, 17], strides = [1, 1]} : vector<800x49xf32> to vector<32x17xf32>
    %83 = arith.addf %81, %82 : vector<32x17xf32>
    %84 = vector.extract_strided_slice %48 {offsets = [576, 24], sizes = [32, 17], strides = [1, 1]} : vector<800x49xf32> to vector<32x17xf32>
    %85 = arith.addf %83, %84 : vector<32x17xf32>
    %86 = vector.extract_strided_slice %48 {offsets = [608, 25], sizes = [32, 17], strides = [1, 1]} : vector<800x49xf32> to vector<32x17xf32>
    %87 = arith.addf %85, %86 : vector<32x17xf32>
    %88 = vector.extract_strided_slice %48 {offsets = [640, 28], sizes = [32, 17], strides = [1, 1]} : vector<800x49xf32> to vector<32x17xf32>
    %89 = arith.addf %87, %88 : vector<32x17xf32>
    %90 = vector.extract_strided_slice %48 {offsets = [672, 29], sizes = [32, 17], strides = [1, 1]} : vector<800x49xf32> to vector<32x17xf32>
    %91 = arith.addf %89, %90 : vector<32x17xf32>
    %92 = vector.extract_strided_slice %48 {offsets = [704, 30], sizes = [32, 17], strides = [1, 1]} : vector<800x49xf32> to vector<32x17xf32>
    %93 = arith.addf %91, %92 : vector<32x17xf32>
    %94 = vector.extract_strided_slice %48 {offsets = [736, 31], sizes = [32, 17], strides = [1, 1]} : vector<800x49xf32> to vector<32x17xf32>
    %95 = arith.addf %93, %94 : vector<32x17xf32>
    %96 = vector.extract_strided_slice %48 {offsets = [768, 32], sizes = [32, 17], strides = [1, 1]} : vector<800x49xf32> to vector<32x17xf32>
    %97 = arith.addf %95, %96 : vector<32x17xf32>
    %98 = vector.extract_strided_slice %97 {offsets = [0, 0], sizes = [32, 3], strides = [1, 1]} : vector<32x17xf32> to vector<32x3xf32>
    %99 = vector.extract_strided_slice %97 {offsets = [0, 7], sizes = [32, 3], strides = [1, 1]} : vector<32x17xf32> to vector<32x3xf32>
    %100 = arith.maximumf %98, %99 : vector<32x3xf32>
    %101 = vector.extract_strided_slice %97 {offsets = [0, 14], sizes = [32, 3], strides = [1, 1]} : vector<32x17xf32> to vector<32x3xf32>
    %102 = arith.maximumf %100, %101 : vector<32x3xf32>
    %cst_16 = arith.constant dense<0xFF800000> : vector<32xf32>
    %103 = vector.multi_reduction <maximumf>, %102, %cst_16 [1] : vector<32x3xf32> to vector<32xf32>
    %104 = vector.shape_cast %103 : vector<32xf32> to vector<32x1xf32>
    %105 = vector.broadcast %104 : vector<32x1xf32> to vector<32x2xf32>
    %106 = arith.mulf %4, %105 : vector<32x2xf32>
    %cst_17 = arith.constant dense<0.000000e+00> : vector<2xf32>
    %107 = vector.multi_reduction <add>, %106, %cst_17 [0] : vector<32x2xf32> to vector<2xf32>
    %108 = vector.shape_cast %107 : vector<2xf32> to vector<1x2xf32>
    %109 = arith.addf %108, %5 : vector<1x2xf32>
    %cst_18 = arith.constant dense<0xFF800000> : vector<1xf32>
    %110 = vector.multi_reduction <maximumf>, %109, %cst_18 [1] : vector<1x2xf32> to vector<1xf32>
    %111 = vector.shape_cast %110 : vector<1xf32> to vector<1x1xf32>
    %112 = vector.broadcast %111 : vector<1x1xf32> to vector<1x2xf32>
    %113 = arith.subf %109, %112 : vector<1x2xf32>
    %114 = math.exp %113 : vector<1x2xf32>
    %cst_19 = arith.constant dense<0.000000e+00> : vector<1xf32>
    %115 = vector.multi_reduction <add>, %114, %cst_19 [1] : vector<1x2xf32> to vector<1xf32>
    %116 = vector.shape_cast %115 : vector<1xf32> to vector<1x1xf32>
    %117 = vector.broadcast %116 : vector<1x1xf32> to vector<1x2xf32>
    %118 = arith.divf %114, %117 : vector<1x2xf32>
    %c0_20 = arith.constant 0 : index
    %c0_21 = arith.constant 0 : index
    %c0_22 = arith.constant 0 : index
    %119 = vector.load %arg8[%c0_20, %c0_21, %c0_22] : memref<1x1x2xf32, #tpu.memory_space<vmem>>, vector<1x1x2xf32>
    %120 = vector.shape_cast %119 : vector<1x1x2xf32> to vector<1x2xf32>
    %121 = vector.shape_cast %118 : vector<1x2xf32> to vector<1x1x2xf32>
    tpu.vector_store %arg8[%c0_20, %c0_21, %c0_22], %121 {strides = array<i32>} : memref<1x1x2xf32, #tpu.memory_space<vmem>>, vector<1x1x2xf32>,
    return
  }
  func.func @transform_0(%arg0: i32) -> (i32, i32, i32) {
    %c0_i32 = arith.constant 0 : i32
    %c0_i32_0 = arith.constant 0 : i32
    %c0_i32_1 = arith.constant 0 : i32
    return %arg0, %c0_i32, %c0_i32_0 : i32, i32, i32
  }
  func.func @transform_1(%arg0: i32) -> (i32, i32) {
    %c0_i32 = arith.constant 0 : i32
    %c0_i32_0 = arith.constant 0 : i32
    %c0_i32_1 = arith.constant 0 : i32
    return %c0_i32, %c0_i32_0 : i32, i32
  }
  func.func @transform_2(%arg0: i32) -> (i32, i32) {
    %c0_i32 = arith.constant 0 : i32
    %c0_i32_0 = arith.constant 0 : i32
    %c0_i32_1 = arith.constant 0 : i32
    return %c0_i32, %c0_i32_0 : i32, i32
  }
  func.func @transform_3(%arg0: i32) -> (i32, i32) {
    %c0_i32 = arith.constant 0 : i32
    %c0_i32_0 = arith.constant 0 : i32
    %c0_i32_1 = arith.constant 0 : i32
    return %c0_i32, %c0_i32_0 : i32, i32
  }
  func.func @transform_4(%arg0: i32) -> (i32, i32) {
    %c0_i32 = arith.constant 0 : i32
    %c0_i32_0 = arith.constant 0 : i32
    %c0_i32_1 = arith.constant 0 : i32
    return %c0_i32, %c0_i32_0 : i32, i32
  }
  func.func @transform_5(%arg0: i32) -> (i32, i32) {
    %c0_i32 = arith.constant 0 : i32
    %c0_i32_0 = arith.constant 0 : i32
    %c0_i32_1 = arith.constant 0 : i32
    return %c0_i32, %c0_i32_0 : i32, i32
  }
  func.func @transform_6(%arg0: i32) -> (i32, i32) {
    %c0_i32 = arith.constant 0 : i32
    %c0_i32_0 = arith.constant 0 : i32
    %c0_i32_1 = arith.constant 0 : i32
    return %c0_i32, %c0_i32_0 : i32, i32
  }
  func.func @transform_7(%arg0: i32) -> (i32, i32, i32) {
    %c0_i32 = arith.constant 0 : i32
    %c0_i32_0 = arith.constant 0 : i32
    %c0_i32_1 = arith.constant 0 : i32
    return %arg0, %c0_i32, %c0_i32_0 : i32, i32, i32
  }
}

</mosaic_0001>

<llo_original>
// kernel: sparsenet_forward.1
$region0: #{sparsenet_forward.1}
  #allocation0 [shape = 'u32[]', space=smem, size = 0x4, offset = 0x4, fixed_abs, tag = 'smem constant byte address 0x4 - core index']
  #allocation1 [shape = 'u32[72,128]{1,0:T(1,128)}', space=vmem, size = 0x9000, scoped, tag = 'internal scratch']
  %s0 = inlined_call_operand.vmem [shape: bf16[2,200,289], index: 0, kind: input, shape index: {}]
  %s1 = inlined_call_operand.vmem [shape: bf16[144,200], index: 1, kind: input, shape index: {}]
  %s2 = inlined_call_operand.vmem [shape: f32[16,1], index: 2, kind: input, shape index: {}]
  %s3 = inlined_call_operand.vmem [shape: bf16[217,49], index: 3, kind: input, shape index: {}]
  %s4 = inlined_call_operand.vmem [shape: bf16[800,16], index: 4, kind: input, shape index: {}]
  %s5 = inlined_call_operand.vmem [shape: f32[32,2], index: 5, kind: input, shape index: {}]
  %s6 = inlined_call_operand.vmem [shape: f32[1,2], index: 6, kind: input, shape index: {}]
  %s7 = inlined_call_operand.hbm [shape: f32[2,1,2], index: 7, kind: output, shape index: {}]
  %s8 = sld [smem:[#allocation0]]
  $region61: #{sparsenet_forward.1} parent=0
    _
  %s10 = ssub.s32 1, %s8
  %s11 = scalar_select 0, %s10, %s8
  $region1: #{sparsenet_forward.1} parent=0
    #allocation2 [shape = 'u8[1024]{0}', space=vmem, size = 0x400, scoped, tag = 'output window, operand 0']
    #allocation3 [shape = 's32[2]{0}', space=sflag, size = 0x8, scoped, tag = 'scoped memory for sparsenet_forward.1']
    %12 = vsyncpa [#allocation3], 0
    %s13 = scalar_lea.sflag [#allocation3], 1
    %14 = vsyncpa %s13, 0
    loop: start=0, step=1, limit=4
    $region2: #{sparsenet_forward.1} parent=1 // loop_pre_header
      _
    $region3: #{sparsenet_forward.1} parent=1 // loop_header
      %s16 = sphi 0, %s20
      %p17 = scmp.ge.s32.totalorder %s16, 4
      %s26 = sphi 0, %s28
      %s29 = sphi 0, %s26
      %s30 = sphi 0, %s29
      %s46 = sphi 0, %s30
      %s50 = sphi 0, %s50
      %s52 = sphi 0, %s50
      %s53 = sphi 0, %s52
      %s67 = sphi 0, %s53
      %s71 = sphi 0, %s71
      %s73 = sphi 0, %s71
      %s74 = sphi 0, %s73
      %s88 = sphi 0, %s74
      %s92 = sphi 0, %s92
      %s94 = sphi 0, %s92
      %s95 = sphi 0, %s94
      %s109 = sphi 0, %s95
      %s113 = sphi 0, %s113
      %s115 = sphi 0, %s113
      %s116 = sphi 0, %s115
      %s130 = sphi 0, %s116
      %s134 = sphi 0, %s134
      %s136 = sphi 0, %s134
      %s137 = sphi 0, %s136
      %s151 = sphi 0, %s137
      %s155 = sphi 0, %s155
      %s157 = sphi 0, %s155
      %s158 = sphi 0, %s157
      %s172 = sphi 0, %s158
      %s178 = sphi 0, %s180
      %s181 = sphi 0, %s178
      %s182 = sphi 0, %s181
      %s198 = sphi 0, %s182
    $region4: #{sparsenet_forward.1} parent=1 // loop_header_branch
      %19 = sbr.rel (%p17) target = $region8
    $region5: #{sparsenet_forward.1} parent=1 // loop_body
      %s21 = ssub.s32 %s16, 1
      %s22 = ssub.s32 %s16, 2
      %s23 = sadd.s32 %s16, 1
      %s24 = ssub.s32 %s16, %s23
      %p25 = scmp.eq.s32.totalorder %s24, 0
      %s27 = sadd.s32 %s26, 1
      %s28 = scalar_select %p25, %s26, %s27
      %p31 = pneg %p25
      %p32 = scmp.eq.s32.totalorder %s16, 1
      %p33 = por %p31, %p32
      %p34 = scmp.ne.s32.totalorder %s26, %s29
      %p35 = scmp.eq.s32.totalorder %s16, 0
      %p36 = por %p34, %p35
      %p37 = scmp.ne.s32.totalorder %s26, %s29
      %p38 = scmp.eq.s32.totalorder %s21, 1
      %p39 = por %p37, %p38
      %p40 = scmp.ne.s32.totalorder %s29, %s30
      %p41 = scmp.eq.s32.totalorder %s21, 0
      %p42 = por %p40, %p41
      %p43 = scmp.ne.s32.totalorder %s29, %s30
      %p44 = scmp.eq.s32.totalorder %s22, 1
      %p45 = por %p43, %p44
      %p47 = scmp.ne.s32.totalorder %s30, %s46
      %p48 = scmp.eq.s32.totalorder %s22, 0
      %p49 = por %p47, %p48
      %s51 = sadd.s32 %s50, 1
      %p54 = scmp.eq.s32.totalorder %s16, 1
      %p55 = scmp.ne.s32.totalorder %s50, %s52
      %p56 = scmp.eq.s32.totalorder %s16, 0
      %p57 = por %p55, %p56
      %p58 = scmp.ne.s32.totalorder %s50, %s52
      %p59 = scmp.eq.s32.totalorder %s21, 1
      %p60 = por %p58, %p59
      %p61 = scmp.ne.s32.totalorder %s52, %s53
      %p62 = scmp.eq.s32.totalorder %s21, 0
      %p63 = por %p61, %p62
      %p64 = scmp.ne.s32.totalorder %s52, %s53
      %p65 = scmp.eq.s32.totalorder %s22, 1
      %p66 = por %p64, %p65
      %p68 = scmp.ne.s32.totalorder %s53, %s67
      %p69 = scmp.eq.s32.totalorder %s22, 0
      %p70 = por %p68, %p69
      %s72 = sadd.s32 %s71, 1
      %p75 = scmp.eq.s32.totalorder %s16, 1
      %p76 = scmp.ne.s32.totalorder %s71, %s73
      %p77 = scmp.eq.s32.totalorder %s16, 0
      %p78 = por %p76, %p77
      %p79 = scmp.ne.s32.totalorder %s71, %s73
      %p80 = scmp.eq.s32.totalorder %s21, 1
      %p81 = por %p79, %p80
      %p82 = scmp.ne.s32.totalorder %s73, %s74
      %p83 = scmp.eq.s32.totalorder %s21, 0
      %p84 = por %p82, %p83
      %p85 = scmp.ne.s32.totalorder %s73, %s74
      %p86 = scmp.eq.s32.totalorder %s22, 1
      %p87 = por %p85, %p86
      %p89 = scmp.ne.s32.totalorder %s74, %s88
      %p90 = scmp.eq.s32.totalorder %s22, 0
      %p91 = por %p89, %p90
      %s93 = sadd.s32 %s92, 1
      %p96 = scmp.eq.s32.totalorder %s16, 1
      %p97 = scmp.ne.s32.totalorder %s92, %s94
      %p98 = scmp.eq.s32.totalorder %s16, 0
      %p99 = por %p97, %p98
      %p100 = scmp.ne.s32.totalorder %s92, %s94
      %p101 = scmp.eq.s32.totalorder %s21, 1
      %p102 = por %p100, %p101
      %p103 = scmp.ne.s32.totalorder %s94, %s95
      %p104 = scmp.eq.s32.totalorder %s21, 0
      %p105 = por %p103, %p104
      %p106 = scmp.ne.s32.totalorder %s94, %s95
      %p107 = scmp.eq.s32.totalorder %s22, 1
      %p108 = por %p106, %p107
      %p110 = scmp.ne.s32.totalorder %s95, %s109
      %p111 = scmp.eq.s32.totalorder %s22, 0
      %p112 = por %p110, %p111
      %s114 = sadd.s32 %s113, 1
      %p117 = scmp.eq.s32.totalorder %s16, 1
      %p118 = scmp.ne.s32.totalorder %s113, %s115
      %p119 = scmp.eq.s32.totalorder %s16, 0
      %p120 = por %p118, %p119
      %p121 = scmp.ne.s32.totalorder %s113, %s115
      %p122 = scmp.eq.s32.totalorder %s21, 1
      %p123 = por %p121, %p122
      %p124 = scmp.ne.s32.totalorder %s115, %s116
      %p125 = scmp.eq.s32.totalorder %s21, 0
      %p126 = por %p124, %p125
      %p127 = scmp.ne.s32.totalorder %s115, %s116
      %p128 = scmp.eq.s32.totalorder %s22, 1
      %p129 = por %p127, %p128
      %p131 = scmp.ne.s32.totalorder %s116, %s130
      %p132 = scmp.eq.s32.totalorder %s22, 0
      %p133 = por %p131, %p132
      %s135 = sadd.s32 %s134, 1
      %p138 = scmp.eq.s32.totalorder %s16, 1
      %p139 = scmp.ne.s32.totalorder %s134, %s136
      %p140 = scmp.eq.s32.totalorder %s16, 0
      %p141 = por %p139, %p140
      %p142 = scmp.ne.s32.totalorder %s134, %s136
      %p143 = scmp.eq.s32.totalorder %s21, 1
      %p144 = por %p142, %p143
      %p145 = scmp.ne.s32.totalorder %s136, %s137
      %p146 = scmp.eq.s32.totalorder %s21, 0
      %p147 = por %p145, %p146
      %p148 = scmp.ne.s32.totalorder %s136, %s137
      %p149 = scmp.eq.s32.totalorder %s22, 1
      %p150 = por %p148, %p149
      %p152 = scmp.ne.s32.totalorder %s137, %s151
      %p153 = scmp.eq.s32.totalorder %s22, 0
      %p154 = por %p152, %p153
      %s156 = sadd.s32 %s155, 1
      %p159 = scmp.eq.s32.totalorder %s16, 1
      %p160 = scmp.ne.s32.totalorder %s155, %s157
      %p161 = scmp.eq.s32.totalorder %s16, 0
      %p162 = por %p160, %p161
      %p163 = scmp.ne.s32.totalorder %s155, %s157
      %p164 = scmp.eq.s32.totalorder %s21, 1
      %p165 = por %p163, %p164
      %p166 = scmp.ne.s32.totalorder %s157, %s158
      %p167 = scmp.eq.s32.totalorder %s21, 0
      %p168 = por %p166, %p167
      %p169 = scmp.ne.s32.totalorder %s157, %s158
      %p170 = scmp.eq.s32.totalorder %s22, 1
      %p171 = por %p169, %p170
      %p173 = scmp.ne.s32.totalorder %s158, %s172
      %p174 = scmp.eq.s32.totalorder %s22, 0
      %p175 = por %p173, %p174
      %s176 = ssub.s32 %s16, %s23
      %p177 = scmp.eq.s32.totalorder %s176, 0
      %s179 = sadd.s32 %s178, 1
      %s180 = scalar_select %p177, %s178, %s179
      %p183 = pneg %p177
      %p184 = scmp.eq.s32.totalorder %s16, 1
      %p185 = por %p183, %p184
      %p186 = scmp.ne.s32.totalorder %s178, %s181
      %p187 = scmp.eq.s32.totalorder %s16, 0
      %p188 = por %p186, %p187
      %p189 = scmp.ne.s32.totalorder %s178, %s181
      %p190 = scmp.eq.s32.totalorder %s21, 1
      %p191 = por %p189, %p190
      %p192 = scmp.ne.s32.totalorder %s181, %s182
      %p193 = scmp.eq.s32.totalorder %s21, 0
      %p194 = por %p192, %p193
      %p195 = scmp.ne.s32.totalorder %s181, %s182
      %p196 = scmp.eq.s32.totalorder %s22, 1
      %p197 = por %p195, %p196
      %p199 = scmp.ne.s32.totalorder %s182, %s198
      %p200 = scmp.eq.s32.totalorder %s22, 0
      %p201 = por %p199, %p200
      %p202 = scmp.le.s32.totalorder 1, %s16
      %p203 = scmp.lt.s32.totalorder %s16, 3
      %p204 = pnand %p202, %p203
      %p205 = pneg %p204
      // Predicated region
      $region9: #{sparsenet_forward.1} parent=5 // pred_check
        _
      $region10: #{sparsenet_forward.1} parent=5 // pred_check_branch
        %207 = sbr.rel (%p204) target = $region12
      $region11: #{sparsenet_forward.1} parent=5 // pred_region
        %s208 = ssub.s32 %s16, 1
        // Predicated region
        $region13: #{sparsenet_forward.1} parent=11 // pred_check
          %p209 = pneg %p63
        $region14: #{sparsenet_forward.1} parent=11 // pred_check_branch
          %211 = sbr.rel (%p209) target = $region16
        $region15: #{sparsenet_forward.1} parent=11 // pred_region
          _
        $region16: #{sparsenet_forward.1} parent=11 // pred_fallthru
          _
        // Predicated region
        $region17: #{sparsenet_forward.1} parent=11 // pred_check
          %p212 = pneg %p84
        $region18: #{sparsenet_forward.1} parent=11 // pred_check_branch
          %214 = sbr.rel (%p212) target = $region20
        $region19: #{sparsenet_forward.1} parent=11 // pred_region
          _
        $region20: #{sparsenet_forward.1} parent=11 // pred_fallthru
          _
        // Predicated region
        $region21: #{sparsenet_forward.1} parent=11 // pred_check
          %p215 = pneg %p105
        $region22: #{sparsenet_forward.1} parent=11 // pred_check_branch
          %217 = sbr.rel (%p215) target = $region24
        $region23: #{sparsenet_forward.1} parent=11 // pred_region
          _
        $region24: #{sparsenet_forward.1} parent=11 // pred_fallthru
          _
        // Predicated region
        $region25: #{sparsenet_forward.1} parent=11 // pred_check
          %p218 = pneg %p126
        $region26: #{sparsenet_forward.1} parent=11 // pred_check_branch
          %220 = sbr.rel (%p218) target = $region28
        $region27: #{sparsenet_forward.1} parent=11 // pred_region
          _
        $region28: #{sparsenet_forward.1} parent=11 // pred_fallthru
          _
        // Predicated region
        $region29: #{sparsenet_forward.1} parent=11 // pred_check
          %p221 = pneg %p147
        $region30: #{sparsenet_forward.1} parent=11 // pred_check_branch
          %223 = sbr.rel (%p221) target = $region32
        $region31: #{sparsenet_forward.1} parent=11 // pred_region
          _
        $region32: #{sparsenet_forward.1} parent=11 // pred_fallthru
          _
        // Predicated region
        $region33: #{sparsenet_forward.1} parent=11 // pred_check
          %p224 = pneg %p168
        $region34: #{sparsenet_forward.1} parent=11 // pred_check_branch
          %226 = sbr.rel (%p224) target = $region36
        $region35: #{sparsenet_forward.1} parent=11 // pred_region
          _
        $region36: #{sparsenet_forward.1} parent=11 // pred_fallthru
          _
      $region12: #{sparsenet_forward.1} parent=5 // pred_fallthru
        _
      %p227 = scmp.lt.s32.totalorder %s16, 2
      // Predicated region
      $region37: #{sparsenet_forward.1} parent=5 // pred_check
        %p228 = pneg %p227
      $region38: #{sparsenet_forward.1} parent=5 // pred_check_branch
        %230 = sbr.rel (%p228) target = $region40
      $region39: #{sparsenet_forward.1} parent=5 // pred_region
        // Predicated region
        $region41: #{sparsenet_forward.1} parent=39 // pred_check
          %p231 = pneg %p36
        $region42: #{sparsenet_forward.1} parent=39 // pred_check_branch
          %233 = sbr.rel (%p231) target = $region44
        $region43: #{sparsenet_forward.1} parent=39 // pred_region
          %p234 = scmp.lt.s32.totalorder %s16, 1
          %s235 = scalar_select %p234, %s16, 1
          %s236 = smul.addr %s235, 75
          %s237 = smul.addr %s236, 4
          %s238 = scalar_lea.vmem %s0, %s237
        $region44: #{sparsenet_forward.1} parent=39 // pred_fallthru
          _
      $region40: #{sparsenet_forward.1} parent=5 // pred_fallthru
        _
      %p239 = scmp.le.s32.totalorder 1, %s16
      %p240 = scmp.lt.s32.totalorder %s16, 3
      %p241 = pnand %p239, %p240
      %p242 = pneg %p241
      // Predicated region
      $region45: #{sparsenet_forward.1} parent=5 // pred_check
        _
      $region46: #{sparsenet_forward.1} parent=5 // pred_check_branch
        %244 = sbr.rel (%p241) target = $region48
      $region47: #{sparsenet_forward.1} parent=5 // pred_region
        %s245 = ssub.s32 %s16, 1
        %p246 = scmp.lt.s32.totalorder %s21, 1
        %s247 = scalar_select %p246, %s21, 1
        %s248 = smul.addr %s247, 75
        %s249 = smul.addr %s248, 4
        %s250 = scalar_lea.vmem %s0, %s249
        %p251 = pneg %p42
        %p252 = pneg %p39
        %p253 = pneg %p63
        %p254 = pneg %p60
        %p255 = pneg %p84
        %p256 = pneg %p81
        %p257 = pneg %p105
        %p258 = pneg %p102
        %p259 = pneg %p126
        %p260 = pneg %p123
        %p261 = pneg %p147
        %p262 = pneg %p144
        %p263 = pneg %p168
        %p264 = pneg %p165
        %p265 = pneg %p194
        %p266 = pneg %p191
        %s267 = sand.u32 %s181, 1
        %s268 = scalar_lea.sflag [#allocation3], %s267
        %s269 = sand.u32 %s181, 1
        %s270 = scalar_lea.vmem [#allocation2], %s269
        %p271 = scmp.lt.s32.totalorder %s21, 1
        %s272 = scalar_select %p271, %s21, 1
        %s273 = smul.addr %s272, 75
        %s274 = smul.addr %s273, 4
        %s275 = scalar_lea.vmem %s0, %s274
        %v277 = vld [vmem:[%s1] sm:$0xff]
        %v278 = vld [vmem:[%s1 + $0x8] sm:$0xff]
        %v279 = vld [vmem:[%s1 + $0x10] sm:$0xff]
        %v280 = vld [vmem:[%s1 + $0x18] sm:$0xff]
        %v281 = vld [vmem:[%s1 + $0x20] sm:$0xff]
        %v282 = vld [vmem:[%s1 + $0x28] sm:$0xff]
        %v283 = vld [vmem:[%s1 + $0x30] sm:$0xff]
        %v284 = vld [vmem:[%s1 + $0x38] sm:$0xff]
        %v285 = vld [vmem:[%s1 + $0x40] sm:$0xff]
        %v286 = vld [vmem:[%s1 + $0x48] sm:$0xff]
        %v287 = vld [vmem:[%s1 + $0x50] sm:$0xff]
        %v288 = vld [vmem:[%s1 + $0x58] sm:$0xff]
        %v289 = vld [vmem:[%s1 + $0x60] sm:$0xff]
        %v290 = vld [vmem:[%s1 + $0x68] sm:$0xff]
        %v291 = vld [vmem:[%s1 + $0x70] sm:$0xff]
        %v292 = vld [vmem:[%s1 + $0x78] sm:$0xff]
        %v293 = vld [vmem:[%s1 + $0x80] sm:$0xff]
        %v294 = vld [vmem:[%s1 + $0x88] sm:$0xff]
        %v295 = vld [vmem:[%s2] sm:$0xff]
        %v296 = vld [vmem:[%s2 + $0x8] sm:$0xff]
        %v297 = vld [vmem:[%s3] sm:$0xf]
        %v298 = vld [vmem:[%s3 + $0x4] sm:$0xf]
        %v299 = vld [vmem:[%s3 + $0x8] sm:$0xf]
        %v300 = vld [vmem:[%s3 + $0xc] sm:$0xf]
        %v301 = vld [vmem:[%s3 + $0x10] sm:$0xf]
        %v302 = vld [vmem:[%s3 + $0x14] sm:$0xf]
        %v303 = vld [vmem:[%s3 + $0x18] sm:$0xf]
        %v304 = vld [vmem:[%s3 + $0x1c] sm:$0xf]
        %v305 = vld [vmem:[%s3 + $0x20] sm:$0xf]
        %v306 = vld [vmem:[%s3 + $0x24] sm:$0xf]
        %v307 = vld [vmem:[%s3 + $0x28] sm:$0xf]
        %v308 = vld [vmem:[%s3 + $0x2c] sm:$0xf]
        %v309 = vld [vmem:[%s3 + $0x30] sm:$0xf]
        %v310 = vld [vmem:[%s3 + $0x34] sm:$0xf]
        %v311 = vld [vmem:[%s3 + $0x38] sm:$0xf]
        %v312 = vld [vmem:[%s3 + $0x3c] sm:$0xf]
        %v313 = vld [vmem:[%s3 + $0x40] sm:$0xf]
        %v314 = vld [vmem:[%s3 + $0x44] sm:$0xf]
        %v315 = vld [vmem:[%s3 + $0x48] sm:$0xf]
        %v316 = vld [vmem:[%s3 + $0x4c] sm:$0xf]
        %v317 = vld [vmem:[%s3 + $0x50] sm:$0xf]
        %v318 = vld [vmem:[%s3 + $0x54] sm:$0xf]
        %v319 = vld [vmem:[%s3 + $0x58] sm:$0xf]
        %v320 = vld [vmem:[%s3 + $0x5c] sm:$0xf]
        %v321 = vld [vmem:[%s3 + $0x60] sm:$0xf]
        %v322 = vld [vmem:[%s3 + $0x64] sm:$0xf]
        %v323 = vld [vmem:[%s3 + $0x68] sm:$0xf]
        %v324 = vld [vmem:[%s3 + $0x6c] sm:$0x1]
        %v325 = vld [vmem:[%s4] sm:$0xf]
        %v326 = vld [vmem:[%s4 + $0x4] sm:$0xf]
        %v327 = vld [vmem:[%s4 + $0x8] sm:$0xf]
        %v328 = vld [vmem:[%s4 + $0xc] sm:$0xf]
        %v329 = vld [vmem:[%s4 + $0x10] sm:$0xf]
        %v330 = vld [vmem:[%s4 + $0x14] sm:$0xf]
        %v331 = vld [vmem:[%s4 + $0x18] sm:$0xf]
        %v332 = vld [vmem:[%s4 + $0x1c] sm:$0xf]
        %v333 = vld [vmem:[%s4 + $0x20] sm:$0xf]
        %v334 = vld [vmem:[%s4 + $0x24] sm:$0xf]
        %v335 = vld [vmem:[%s4 + $0x28] sm:$0xf]
        %v336 = vld [vmem:[%s4 + $0x2c] sm:$0xf]
        %v337 = vld [vmem:[%s4 + $0x30] sm:$0xf]
        %v338 = vld [vmem:[%s4 + $0x34] sm:$0xf]
        %v339 = vld [vmem:[%s4 + $0x38] sm:$0xf]
        %v340 = vld [vmem:[%s4 + $0x3c] sm:$0xf]
        %v341 = vld [vmem:[%s4 + $0x40] sm:$0xf]
        %v342 = vld [vmem:[%s4 + $0x44] sm:$0xf]
        %v343 = vld [vmem:[%s4 + $0x48] sm:$0xf]
        %v344 = vld [vmem:[%s4 + $0x4c] sm:$0xf]
        %v345 = vld [vmem:[%s4 + $0x50] sm:$0xf]
        %v346 = vld [vmem:[%s4 + $0x54] sm:$0xf]
        %v347 = vld [vmem:[%s4 + $0x58] sm:$0xf]
        %v348 = vld [vmem:[%s4 + $0x5c] sm:$0xf]
        %v349 = vld [vmem:[%s4 + $0x60] sm:$0xf]
        %v350 = vld [vmem:[%s4 + $0x64] sm:$0xf]
        %v351 = vld [vmem:[%s4 + $0x68] sm:$0xf]
        %v352 = vld [vmem:[%s4 + $0x6c] sm:$0xf]
        %v353 = vld [vmem:[%s4 + $0x70] sm:$0xf]
        %v354 = vld [vmem:[%s4 + $0x74] sm:$0xf]
        %v355 = vld [vmem:[%s4 + $0x78] sm:$0xf]
        %v356 = vld [vmem:[%s4 + $0x7c] sm:$0xf]
        %v357 = vld [vmem:[%s4 + $0x80] sm:$0xf]
        %v358 = vld [vmem:[%s4 + $0x84] sm:$0xf]
        %v359 = vld [vmem:[%s4 + $0x88] sm:$0xf]
        %v360 = vld [vmem:[%s4 + $0x8c] sm:$0xf]
        %v361 = vld [vmem:[%s4 + $0x90] sm:$0xf]
        %v362 = vld [vmem:[%s4 + $0x94] sm:$0xf]
        %v363 = vld [vmem:[%s4 + $0x98] sm:$0xf]
        %v364 = vld [vmem:[%s4 + $0x9c] sm:$0xf]
        %v365 = vld [vmem:[%s4 + $0xa0] sm:$0xf]
        %v366 = vld [vmem:[%s4 + $0xa4] sm:$0xf]
        %v367 = vld [vmem:[%s4 + $0xa8] sm:$0xf]
        %v368 = vld [vmem:[%s4 + $0xac] sm:$0xf]
        %v369 = vld [vmem:[%s4 + $0xb0] sm:$0xf]
        %v370 = vld [vmem:[%s4 + $0xb4] sm:$0xf]
        %v371 = vld [vmem:[%s4 + $0xb8] sm:$0xf]
        %v372 = vld [vmem:[%s4 + $0xbc] sm:$0xf]
        %v373 = vld [vmem:[%s4 + $0xc0] sm:$0xf]
        %v374 = vld [vmem:[%s4 + $0xc4] sm:$0xf]
        %v375 = vld [vmem:[%s4 + $0xc8] sm:$0xf]
        %v376 = vld [vmem:[%s4 + $0xcc] sm:$0xf]
        %v377 = vld [vmem:[%s4 + $0xd0] sm:$0xf]
        %v378 = vld [vmem:[%s4 + $0xd4] sm:$0xf]
        %v379 = vld [vmem:[%s4 + $0xd8] sm:$0xf]
        %v380 = vld [vmem:[%s4 + $0xdc] sm:$0xf]
        %v381 = vld [vmem:[%s4 + $0xe0] sm:$0xf]
        %v382 = vld [vmem:[%s4 + $0xe4] sm:$0xf]
        %v383 = vld [vmem:[%s4 + $0xe8] sm:$0xf]
        %v384 = vld [vmem:[%s4 + $0xec] sm:$0xf]
        %v385 = vld [vmem:[%s4 + $0xf0] sm:$0xf]
        %v386 = vld [vmem:[%s4 + $0xf4] sm:$0xf]
        %v387 = vld [vmem:[%s4 + $0xf8] sm:$0xf]
        %v388 = vld [vmem:[%s4 + $0xfc] sm:$0xf]
        %v389 = vld [vmem:[%s4 + $0x100] sm:$0xf]
        %v390 = vld [vmem:[%s4 + $0x104] sm:$0xf]
        %v391 = vld [vmem:[%s4 + $0x108] sm:$0xf]
        %v392 = vld [vmem:[%s4 + $0x10c] sm:$0xf]
        %v393 = vld [vmem:[%s4 + $0x110] sm:$0xf]
        %v394 = vld [vmem:[%s4 + $0x114] sm:$0xf]
        %v395 = vld [vmem:[%s4 + $0x118] sm:$0xf]
        %v396 = vld [vmem:[%s4 + $0x11c] sm:$0xf]
        %v397 = vld [vmem:[%s4 + $0x120] sm:$0xf]
        %v398 = vld [vmem:[%s4 + $0x124] sm:$0xf]
        %v399 = vld [vmem:[%s4 + $0x128] sm:$0xf]
        %v400 = vld [vmem:[%s4 + $0x12c] sm:$0xf]
        %v401 = vld [vmem:[%s4 + $0x130] sm:$0xf]
        %v402 = vld [vmem:[%s4 + $0x134] sm:$0xf]
        %v403 = vld [vmem:[%s4 + $0x138] sm:$0xf]
        %v404 = vld [vmem:[%s4 + $0x13c] sm:$0xf]
        %v405 = vld [vmem:[%s4 + $0x140] sm:$0xf]
        %v406 = vld [vmem:[%s4 + $0x144] sm:$0xf]
        %v407 = vld [vmem:[%s4 + $0x148] sm:$0xf]
        %v408 = vld [vmem:[%s4 + $0x14c] sm:$0xf]
        %v409 = vld [vmem:[%s4 + $0x150] sm:$0xf]
        %v410 = vld [vmem:[%s4 + $0x154] sm:$0xf]
        %v411 = vld [vmem:[%s4 + $0x158] sm:$0xf]
        %v412 = vld [vmem:[%s4 + $0x15c] sm:$0xf]
        %v413 = vld [vmem:[%s4 + $0x160] sm:$0xf]
        %v414 = vld [vmem:[%s4 + $0x164] sm:$0xf]
        %v415 = vld [vmem:[%s4 + $0x168] sm:$0xf]
        %v416 = vld [vmem:[%s4 + $0x16c] sm:$0xf]
        %v417 = vld [vmem:[%s4 + $0x170] sm:$0xf]
        %v418 = vld [vmem:[%s4 + $0x174] sm:$0xf]
        %v419 = vld [vmem:[%s4 + $0x178] sm:$0xf]
        %v420 = vld [vmem:[%s4 + $0x17c] sm:$0xf]
        %v421 = vld [vmem:[%s4 + $0x180] sm:$0xf]
        %v422 = vld [vmem:[%s4 + $0x184] sm:$0xf]
        %v423 = vld [vmem:[%s4 + $0x188] sm:$0xf]
        %v424 = vld [vmem:[%s4 + $0x18c] sm:$0xf]
        %v425 = vld [vmem:[%s5] sm:$0xff]
        %v426 = vld [vmem:[%s5 + $0x8] sm:$0xff]
        %v427 = vld [vmem:[%s5 + $0x10] sm:$0xff]
        %v428 = vld [vmem:[%s5 + $0x18] sm:$0xff]
        %v429 = vld [vmem:[%s6] sm:$0x1]
        %v430 = vld [vmem:[%s275] sm:$0xff]
        %v431 = vld [vmem:[%s275 + $0x8] sm:$0xf]
        %v432 = vld [vmem:[%s275 + $0xc] sm:$0xff]
        %v433 = vld [vmem:[%s275 + $0x14] sm:$0xf]
        %v434 = vld [vmem:[%s275 + $0x18] sm:$0xff]
        %v435 = vld [vmem:[%s275 + $0x20] sm:$0xf]
        %v436 = vld [vmem:[%s275 + $0x24] sm:$0xff]
        %v437 = vld [vmem:[%s275 + $0x2c] sm:$0xf]
        %v438 = vld [vmem:[%s275 + $0x30] sm:$0xff]
        %v439 = vld [vmem:[%s275 + $0x38] sm:$0xf]
        %v440 = vld [vmem:[%s275 + $0x3c] sm:$0xff]
        %v441 = vld [vmem:[%s275 + $0x44] sm:$0xf]
        %v442 = vld [vmem:[%s275 + $0x48] sm:$0xff]
        %v443 = vld [vmem:[%s275 + $0x50] sm:$0xf]
        %v444 = vld [vmem:[%s275 + $0x54] sm:$0xff]
        %v445 = vld [vmem:[%s275 + $0x5c] sm:$0xf]
        %v446 = vld [vmem:[%s275 + $0x60] sm:$0xff]
        %v447 = vld [vmem:[%s275 + $0x68] sm:$0xf]
        %v448 = vld [vmem:[%s275 + $0x6c] sm:$0xff]
        %v449 = vld [vmem:[%s275 + $0x74] sm:$0xf]
        %v450 = vld [vmem:[%s275 + $0x78] sm:$0xff]
        %v451 = vld [vmem:[%s275 + $0x80] sm:$0xf]
        %v452 = vld [vmem:[%s275 + $0x84] sm:$0xff]
        %v453 = vld [vmem:[%s275 + $0x8c] sm:$0xf]
        %v454 = vld [vmem:[%s275 + $0x90] sm:$0xff]
        %v455 = vld [vmem:[%s275 + $0x98] sm:$0xf]
        %v456 = vld [vmem:[%s275 + $0x9c] sm:$0xff]
        %v457 = vld [vmem:[%s275 + $0xa4] sm:$0xf]
        %v458 = vld [vmem:[%s275 + $0xa8] sm:$0xff]
        %v459 = vld [vmem:[%s275 + $0xb0] sm:$0xf]
        %v460 = vld [vmem:[%s275 + $0xb4] sm:$0xff]
        %v461 = vld [vmem:[%s275 + $0xbc] sm:$0xf]
        %v462 = vld [vmem:[%s275 + $0xc0] sm:$0xff]
        %v463 = vld [vmem:[%s275 + $0xc8] sm:$0xf]
        %v464 = vld [vmem:[%s275 + $0xcc] sm:$0xff]
        %v465 = vld [vmem:[%s275 + $0xd4] sm:$0xf]
        %v466 = vld [vmem:[%s275 + $0xd8] sm:$0xff]
        %v467 = vld [vmem:[%s275 + $0xe0] sm:$0xf]
        %v468 = vld [vmem:[%s275 + $0xe4] sm:$0xff]
        %v469 = vld [vmem:[%s275 + $0xec] sm:$0xf]
        %v470 = vld [vmem:[%s275 + $0xf0] sm:$0xff]
        %v471 = vld [vmem:[%s275 + $0xf8] sm:$0xf]
        %v472 = vld [vmem:[%s275 + $0xfc] sm:$0xff]
        %v473 = vld [vmem:[%s275 + $0x104] sm:$0xf]
        %v474 = vld [vmem:[%s275 + $0x108] sm:$0xff]
        %v475 = vld [vmem:[%s275 + $0x110] sm:$0xf]
        %v476 = vld [vmem:[%s275 + $0x114] sm:$0xff]
        %v477 = vld [vmem:[%s275 + $0x11c] sm:$0xf]
        %v478 = vld [vmem:[%s275 + $0x120] sm:$0xff]
        %v479 = vld [vmem:[%s275 + $0x128] sm:$0xf]
        %v498 = vunpack.c.l.b16 %v277
        %v499 = vunpack.c.h.b16 %v277
        %v500 = vunpack.c.l.b16 %v278
        %v501 = vunpack.c.h.b16 %v278
        %v502 = vunpack.c.l.b16 %v279
        %v503 = vunpack.c.h.b16 %v279
        %v504 = vunpack.c.l.b16 %v280
        %v505 = vunpack.c.h.b16 %v280
        %v506 = vunpack.c.l.b16 %v281
        %v507 = vunpack.c.h.b16 %v281
        %v508 = vunpack.c.l.b16 %v282
        %v509 = vunpack.c.h.b16 %v282
        %v510 = vunpack.c.l.b16 %v283
        %v511 = vunpack.c.h.b16 %v283
        %v512 = vunpack.c.l.b16 %v284
        %v513 = vunpack.c.h.b16 %v284
        %v514 = vunpack.c.l.b16 %v285
        %v515 = vunpack.c.h.b16 %v285
        %v516 = vunpack.c.l.b16 %v286
        %v517 = vunpack.c.h.b16 %v286
        %v518 = vunpack.c.l.b16 %v287
        %v519 = vunpack.c.h.b16 %v287
        %v520 = vunpack.c.l.b16 %v288
        %v521 = vunpack.c.h.b16 %v288
        %v522 = vunpack.c.l.b16 %v289
        %v523 = vunpack.c.h.b16 %v289
        %v524 = vunpack.c.l.b16 %v290
        %v525 = vunpack.c.h.b16 %v290
        %v526 = vunpack.c.l.b16 %v291
        %v527 = vunpack.c.h.b16 %v291
        %v528 = vunpack.c.l.b16 %v292
        %v529 = vunpack.c.h.b16 %v292
        %v530 = vunpack.c.l.b16 %v293
        %v531 = vunpack.c.h.b16 %v293
        %v532 = vunpack.c.l.b16 %v294
        %v533 = vunpack.c.h.b16 %v294
        %v534 = vpack.c.b16 %v500, %v498
        %v535 = vpack.c.b16 %v501, %v499
        %v536 = vpack.c.b16 %v504, %v502
        %v537 = vpack.c.b16 %v505, %v503
        %v538 = vpack.c.b16 %v508, %v506
        %v539 = vpack.c.b16 %v509, %v507
        %v540 = vpack.c.b16 %v512, %v510
        %v541 = vpack.c.b16 %v513, %v511
        %v542 = vpack.c.b16 %v516, %v514
        %v543 = vpack.c.b16 %v517, %v515
        %v544 = vpack.c.b16 %v520, %v518
        %v545 = vpack.c.b16 %v521, %v519
        %v546 = vpack.c.b16 %v524, %v522
        %v547 = vpack.c.b16 %v525, %v523
        %v548 = vpack.c.b16 %v528, %v526
        %v549 = vpack.c.b16 %v529, %v527
        %v550 = vpack.c.b16 %v532, %v530
        %v551 = vpack.c.b16 %v533, %v531
        %v611 = vunpack.c.l.b16 %v430
        %v612 = vunpack.c.h.b16 %v430
        %v613 = vunpack.c.l.b16 %v431
        %v614 = vunpack.c.l.b16 %v432
        %v615 = vunpack.c.h.b16 %v432
        %v616 = vunpack.c.l.b16 %v433
        %v617 = vunpack.c.l.b16 %v434
        %v618 = vunpack.c.h.b16 %v434
        %v619 = vunpack.c.l.b16 %v435
        %v620 = vunpack.c.l.b16 %v436
        %v621 = vunpack.c.h.b16 %v436
        %v622 = vunpack.c.l.b16 %v437
        %v623 = vunpack.c.l.b16 %v438
        %v624 = vunpack.c.h.b16 %v438
        %v625 = vunpack.c.l.b16 %v439
        %v626 = vunpack.c.l.b16 %v440
        %v627 = vunpack.c.h.b16 %v440
        %v628 = vunpack.c.l.b16 %v441
        %v629 = vunpack.c.l.b16 %v442
        %v630 = vunpack.c.h.b16 %v442
        %v631 = vunpack.c.l.b16 %v443
        %v632 = vunpack.c.l.b16 %v444
        %v633 = vunpack.c.h.b16 %v444
        %v634 = vunpack.c.l.b16 %v445
        %v635 = vunpack.c.l.b16 %v446
        %v636 = vunpack.c.h.b16 %v446
        %v637 = vunpack.c.l.b16 %v447
        %v638 = vunpack.c.l.b16 %v448
        %v639 = vunpack.c.h.b16 %v448
        %v640 = vunpack.c.l.b16 %v449
        %v641 = vunpack.c.l.b16 %v450
        %v642 = vunpack.c.h.b16 %v450
        %v643 = vunpack.c.l.b16 %v451
        %v644 = vunpack.c.l.b16 %v452
        %v645 = vunpack.c.h.b16 %v452
        %v646 = vunpack.c.l.b16 %v453
        %v647 = vunpack.c.l.b16 %v454
        %v648 = vunpack.c.h.b16 %v454
        %v649 = vunpack.c.l.b16 %v455
        %v650 = vunpack.c.l.b16 %v456
        %v651 = vunpack.c.h.b16 %v456
        %v652 = vunpack.c.l.b16 %v457
        %v653 = vunpack.c.l.b16 %v458
        %v654 = vunpack.c.h.b16 %v458
        %v655 = vunpack.c.l.b16 %v459
        %v656 = vunpack.c.l.b16 %v460
        %v657 = vunpack.c.h.b16 %v460
        %v658 = vunpack.c.l.b16 %v461
        %v659 = vunpack.c.l.b16 %v462
        %v660 = vunpack.c.h.b16 %v462
        %v661 = vunpack.c.l.b16 %v463
        %v662 = vunpack.c.l.b16 %v464
        %v663 = vunpack.c.h.b16 %v464
        %v664 = vunpack.c.l.b16 %v465
        %v665 = vunpack.c.l.b16 %v466
        %v666 = vunpack.c.h.b16 %v466
        %v667 = vunpack.c.l.b16 %v467
        %v668 = vunpack.c.l.b16 %v468
        %v669 = vunpack.c.h.b16 %v468
        %v670 = vunpack.c.l.b16 %v469
        %v671 = vunpack.c.l.b16 %v470
        %v672 = vunpack.c.h.b16 %v470
        %v673 = vunpack.c.l.b16 %v471
        %v674 = vunpack.c.l.b16 %v472
        %v675 = vunpack.c.h.b16 %v472
        %v676 = vunpack.c.l.b16 %v473
        %v677 = vunpack.c.l.b16 %v474
        %v678 = vunpack.c.h.b16 %v474
        %v679 = vunpack.c.l.b16 %v475
        %v680 = vunpack.c.l.b16 %v476
        %v681 = vunpack.c.h.b16 %v476
        %v682 = vunpack.c.l.b16 %v477
        %v683 = vunpack.c.l.b16 %v478
        %v684 = vunpack.c.h.b16 %v478
        %v685 = vunpack.c.l.b16 %v479
        %v686 = vpack.c.b16 %v614, %v611
        %v687 = vpack.c.b16 %v615, %v612
        %v688 = vpack.c.b16 %v616, %v613
        %v689 = vpack.c.b16 %v620, %v617
        %v690 = vpack.c.b16 %v621, %v618
        %v691 = vpack.c.b16 %v622, %v619
        %v692 = vpack.c.b16 %v626, %v623
        %v693 = vpack.c.b16 %v627, %v624
        %v694 = vpack.c.b16 %v628, %v625
        %v695 = vpack.c.b16 %v632, %v629
        %v696 = vpack.c.b16 %v633, %v630
        %v697 = vpack.c.b16 %v634, %v631
        %v698 = vpack.c.b16 %v638, %v635
        %v699 = vpack.c.b16 %v639, %v636
        %v700 = vpack.c.b16 %v640, %v637
        %v701 = vpack.c.b16 %v644, %v641
        %v702 = vpack.c.b16 %v645, %v642
        %v703 = vpack.c.b16 %v646, %v643
        %v704 = vpack.c.b16 %v650, %v647
        %v705 = vpack.c.b16 %v651, %v648
        %v706 = vpack.c.b16 %v652, %v649
        %v707 = vpack.c.b16 %v656, %v653
        %v708 = vpack.c.b16 %v657, %v654
        %v709 = vpack.c.b16 %v658, %v655
        %v710 = vpack.c.b16 %v662, %v659
        %v711 = vpack.c.b16 %v663, %v660
        %v712 = vpack.c.b16 %v664, %v661
        %v713 = vpack.c.b16 %v668, %v665
        %v714 = vpack.c.b16 %v669, %v666
        %v715 = vpack.c.b16 %v670, %v667
        %v716 = vpack.c.b16 %v674, %v671
        %v717 = vpack.c.b16 %v675, %v672
        %v718 = vpack.c.b16 %v676, %v673
        %v719 = vpack.c.b16 %v680, %v677
        %v720 = vpack.c.b16 %v681, %v678
        %v721 = vpack.c.b16 %v682, %v679
        %v722 = vpack.c.b16 %v683, %v683
        %v723 = vpack.c.b16 %v684, %v684
        %v724 = vpack.c.b16 %v685, %v685
        %vm761 = vcmask 588800
        %v763 = vsel %vm761, %v535, 0
        %v766 = vsel %vm761, %v537, 0
        %v769 = vsel %vm761, %v539, 0
        %v772 = vsel %vm761, %v541, 0
        %v775 = vsel %vm761, %v543, 0
        %v778 = vsel %vm761, %v545, 0
        %v781 = vsel %vm761, %v547, 0
        %v784 = vsel %vm761, %v549, 0
        %v787 = vsel %vm761, %v551, 0
        %vm789 = vcmask 1043456
        %v791 = vsel %vm789, %v722, 0
        %v794 = vsel %vm789, %v723, 0
        %v797 = vsel %vm789, %v724, 0
        %799 = vmatpush.bf16.msra.mxu0 %v707
        %800 = vmatpush.bf16.msra.mxu0 %v704
        %801 = vmatpush.bf16.msra.mxu0 %v701
        %802 = vmatpush.bf16.msra.mxu0 %v698
        %803 = vmatpush.bf16.msra.mxu0 %v695
        %804 = vmatpush.bf16.msra.mxu0 %v692
        %805 = vmatpush.bf16.msra.mxu0 %v689
        %806 = vmatpush.bf16.msra.mxu0 %v686
        %807 = vmatmul.bf16.gmra.mxu0 %v534
        %v808 = vpop.f32.mrf.mxu0
        %v809 = vadd.f32 0.0, %v808
        %v810 = vpop.f32.mrf.mxu0
        %v811 = vadd.f32 0.0, %v810
        %812 = vmatmul.bf16.gmra.mxu0 %v536
        %v813 = vpop.f32.mrf.mxu0
        %v814 = vadd.f32 0.0, %v813
        %v815 = vpop.f32.mrf.mxu0
        %v816 = vadd.f32 0.0, %v815
        %817 = vmatmul.bf16.gmra.mxu0 %v538
        %v818 = vpop.f32.mrf.mxu0
        %v819 = vadd.f32 0.0, %v818
        %v820 = vpop.f32.mrf.mxu0
        %v821 = vadd.f32 0.0, %v820
        %822 = vmatmul.bf16.gmra.mxu0 %v540
        %v823 = vpop.f32.mrf.mxu0
        %v824 = vadd.f32 0.0, %v823
        %v825 = vpop.f32.mrf.mxu0
        %v826 = vadd.f32 0.0, %v825
        %827 = vmatmul.bf16.gmra.mxu0 %v542
        %v828 = vpop.f32.mrf.mxu0
        %v829 = vadd.f32 0.0, %v828
        %v830 = vpop.f32.mrf.mxu0
        %v831 = vadd.f32 0.0, %v830
        %832 = vmatmul.bf16.gmra.mxu0 %v544
        %v833 = vpop.f32.mrf.mxu0
        %v834 = vadd.f32 0.0, %v833
        %v835 = vpop.f32.mrf.mxu0
        %v836 = vadd.f32 0.0, %v835
        %837 = vmatmul.bf16.gmra.mxu0 %v546
        %v838 = vpop.f32.mrf.mxu0
        %v839 = vadd.f32 0.0, %v838
        %v840 = vpop.f32.mrf.mxu0
        %v841 = vadd.f32 0.0, %v840
        %842 = vmatmul.bf16.gmra.mxu0 %v548
        %v843 = vpop.f32.mrf.mxu0
        %v844 = vadd.f32 0.0, %v843
        %v845 = vpop.f32.mrf.mxu0
        %v846 = vadd.f32 0.0, %v845
        %847 = vmatmul.bf16.gmra.mxu0 %v550
        %v848 = vpop.f32.mrf.mxu0
        %v849 = vadd.f32 0.0, %v848
        %v850 = vpop.f32.mrf.mxu0
        %v851 = vadd.f32 0.0, %v850
        %852 = vdwg.mxu0
        %853 = vmatpush.bf16.msra.mxu0 0
        %854 = vmatpush.bf16.msra.mxu0 0
        %855 = vmatpush.bf16.msra.mxu0 0
        %856 = vmatpush.bf16.msra.mxu0 %v791
        %857 = vmatpush.bf16.msra.mxu0 %v719
        %858 = vmatpush.bf16.msra.mxu0 %v716
        %859 = vmatpush.bf16.msra.mxu0 %v713
        %860 = vmatpush.bf16.msra.mxu0 %v710
        %861 = vmatmul.bf16.gmra.mxu0 %v763
        %v862 = vpop.f32.mrf.mxu0
        %v863 = vadd.f32 %v809, %v862
        %v864 = vpop.f32.mrf.mxu0
        %v865 = vadd.f32 %v811, %v864
        %866 = vmatmul.bf16.gmra.mxu0 %v766
        %v867 = vpop.f32.mrf.mxu0
        %v868 = vadd.f32 %v814, %v867
        %v869 = vpop.f32.mrf.mxu0
        %v870 = vadd.f32 %v816, %v869
        %871 = vmatmul.bf16.gmra.mxu0 %v769
        %v872 = vpop.f32.mrf.mxu0
        %v873 = vadd.f32 %v819, %v872
        %v874 = vpop.f32.mrf.mxu0
        %v875 = vadd.f32 %v821, %v874
        %876 = vmatmul.bf16.gmra.mxu0 %v772
        %v877 = vpop.f32.mrf.mxu0
        %v878 = vadd.f32 %v824, %v877
        %v879 = vpop.f32.mrf.mxu0
        %v880 = vadd.f32 %v826, %v879
        %881 = vmatmul.bf16.gmra.mxu0 %v775
        %v882 = vpop.f32.mrf.mxu0
        %v883 = vadd.f32 %v829, %v882
        %v884 = vpop.f32.mrf.mxu0
        %v885 = vadd.f32 %v831, %v884
        %886 = vmatmul.bf16.gmra.mxu0 %v778
        %v887 = vpop.f32.mrf.mxu0
        %v888 = vadd.f32 %v834, %v887
        %v889 = vpop.f32.mrf.mxu0
        %v890 = vadd.f32 %v836, %v889
        %891 = vmatmul.bf16.gmra.mxu0 %v781
        %v892 = vpop.f32.mrf.mxu0
        %v893 = vadd.f32 %v839, %v892
        %v894 = vpop.f32.mrf.mxu0
        %v895 = vadd.f32 %v841, %v894
        %896 = vmatmul.bf16.gmra.mxu0 %v784
        %v897 = vpop.f32.mrf.mxu0
        %v898 = vadd.f32 %v844, %v897
        %v899 = vpop.f32.mrf.mxu0
        %v900 = vadd.f32 %v846, %v899
        %901 = vmatmul.bf16.gmra.mxu0 %v787
        %v902 = vpop.f32.mrf.mxu0
        %v903 = vadd.f32 %v849, %v902
        %v904 = vpop.f32.mrf.mxu0
        %v905 = vadd.f32 %v851, %v904
        %906 = vdwg.mxu0
        %907 = vmatpush.bf16.msra.mxu0 %v708
        %908 = vmatpush.bf16.msra.mxu0 %v705
        %909 = vmatpush.bf16.msra.mxu0 %v702
        %910 = vmatpush.bf16.msra.mxu0 %v699
        %911 = vmatpush.bf16.msra.mxu0 %v696
        %912 = vmatpush.bf16.msra.mxu0 %v693
        %913 = vmatpush.bf16.msra.mxu0 %v690
        %914 = vmatpush.bf16.msra.mxu0 %v687
        %915 = vmatmul.bf16.gmra.mxu0 %v534
        %v916 = vpop.f32.mrf.mxu0
        %v917 = vadd.f32 0.0, %v916
        %v918 = vpop.f32.mrf.mxu0
        %v919 = vadd.f32 0.0, %v918
        %920 = vmatmul.bf16.gmra.mxu0 %v536
        %v921 = vpop.f32.mrf.mxu0
        %v922 = vadd.f32 0.0, %v921
        %v923 = vpop.f32.mrf.mxu0
        %v924 = vadd.f32 0.0, %v923
        %925 = vmatmul.bf16.gmra.mxu0 %v538
        %v926 = vpop.f32.mrf.mxu0
        %v927 = vadd.f32 0.0, %v926
        %v928 = vpop.f32.mrf.mxu0
        %v929 = vadd.f32 0.0, %v928
        %930 = vmatmul.bf16.gmra.mxu0 %v540
        %v931 = vpop.f32.mrf.mxu0
        %v932 = vadd.f32 0.0, %v931
        %v933 = vpop.f32.mrf.mxu0
        %v934 = vadd.f32 0.0, %v933
        %935 = vmatmul.bf16.gmra.mxu0 %v542
        %v936 = vpop.f32.mrf.mxu0
        %v937 = vadd.f32 0.0, %v936
        %v938 = vpop.f32.mrf.mxu0
        %v939 = vadd.f32 0.0, %v938
        %940 = vmatmul.bf16.gmra.mxu0 %v544
        %v941 = vpop.f32.mrf.mxu0
        %v942 = vadd.f32 0.0, %v941
        %v943 = vpop.f32.mrf.mxu0
        %v944 = vadd.f32 0.0, %v943
        %945 = vmatmul.bf16.gmra.mxu0 %v546
        %v946 = vpop.f32.mrf.mxu0
        %v947 = vadd.f32 0.0, %v946
        %v948 = vpop.f32.mrf.mxu0
        %v949 = vadd.f32 0.0, %v948
        %950 = vmatmul.bf16.gmra.mxu0 %v548
        %v951 = vpop.f32.mrf.mxu0
        %v952 = vadd.f32 0.0, %v951
        %v953 = vpop.f32.mrf.mxu0
        %v954 = vadd.f32 0.0, %v953
        %955 = vmatmul.bf16.gmra.mxu0 %v550
        %v956 = vpop.f32.mrf.mxu0
        %v957 = vadd.f32 0.0, %v956
        %v958 = vpop.f32.mrf.mxu0
        %v959 = vadd.f32 0.0, %v958
        %960 = vdwg.mxu0
        %961 = vmatpush.bf16.msra.mxu0 0
        %962 = vmatpush.bf16.msra.mxu0 0
        %963 = vmatpush.bf16.msra.mxu0 0
        %964 = vmatpush.bf16.msra.mxu0 %v794
        %965 = vmatpush.bf16.msra.mxu0 %v720
        %966 = vmatpush.bf16.msra.mxu0 %v717
        %967 = vmatpush.bf16.msra.mxu0 %v714
        %968 = vmatpush.bf16.msra.mxu0 %v711
        %969 = vmatmul.bf16.gmra.mxu0 %v763
        %v970 = vpop.f32.mrf.mxu0
        %v971 = vadd.f32 %v917, %v970
        %v972 = vpop.f32.mrf.mxu0
        %v973 = vadd.f32 %v919, %v972
        %974 = vmatmul.bf16.gmra.mxu0 %v766
        %v975 = vpop.f32.mrf.mxu0
        %v976 = vadd.f32 %v922, %v975
        %v977 = vpop.f32.mrf.mxu0
        %v978 = vadd.f32 %v924, %v977
        %979 = vmatmul.bf16.gmra.mxu0 %v769
        %v980 = vpop.f32.mrf.mxu0
        %v981 = vadd.f32 %v927, %v980
        %v982 = vpop.f32.mrf.mxu0
        %v983 = vadd.f32 %v929, %v982
        %984 = vmatmul.bf16.gmra.mxu0 %v772
        %v985 = vpop.f32.mrf.mxu0
        %v986 = vadd.f32 %v932, %v985
        %v987 = vpop.f32.mrf.mxu0
        %v988 = vadd.f32 %v934, %v987
        %989 = vmatmul.bf16.gmra.mxu0 %v775
        %v990 = vpop.f32.mrf.mxu0
        %v991 = vadd.f32 %v937, %v990
        %v992 = vpop.f32.mrf.mxu0
        %v993 = vadd.f32 %v939, %v992
        %994 = vmatmul.bf16.gmra.mxu0 %v778
        %v995 = vpop.f32.mrf.mxu0
        %v996 = vadd.f32 %v942, %v995
        %v997 = vpop.f32.mrf.mxu0
        %v998 = vadd.f32 %v944, %v997
        %999 = vmatmul.bf16.gmra.mxu0 %v781
        %v1000 = vpop.f32.mrf.mxu0
        %v1001 = vadd.f32 %v947, %v1000
        %v1002 = vpop.f32.mrf.mxu0
        %v1003 = vadd.f32 %v949, %v1002
        %1004 = vmatmul.bf16.gmra.mxu0 %v784
        %v1005 = vpop.f32.mrf.mxu0
        %v1006 = vadd.f32 %v952, %v1005
        %v1007 = vpop.f32.mrf.mxu0
        %v1008 = vadd.f32 %v954, %v1007
        %1009 = vmatmul.bf16.gmra.mxu0 %v787
        %v1010 = vpop.f32.mrf.mxu0
        %v1011 = vadd.f32 %v957, %v1010
        %v1012 = vpop.f32.mrf.mxu0
        %v1013 = vadd.f32 %v959, %v1012
        %1014 = vdwg.mxu0
        %1015 = vmatpush.bf16.msra.mxu0 %v709
        %1016 = vmatpush.bf16.msra.mxu0 %v706
        %1017 = vmatpush.bf16.msra.mxu0 %v703
        %1018 = vmatpush.bf16.msra.mxu0 %v700
        %1019 = vmatpush.bf16.msra.mxu0 %v697
        %1020 = vmatpush.bf16.msra.mxu0 %v694
        %1021 = vmatpush.bf16.msra.mxu0 %v691
        %1022 = vmatpush.bf16.msra.mxu0 %v688
        %1023 = vmatmul.bf16.gmra.mxu0 %v534
        %v1024 = vpop.f32.mrf.mxu0
        %v1025 = vpop.f32.mrf.mxu0
        %1026 = vmatmul.bf16.gmra.mxu0 %v536
        %v1027 = vpop.f32.mrf.mxu0
        %v1028 = vpop.f32.mrf.mxu0
        %1029 = vmatmul.bf16.gmra.mxu0 %v538
        %v1030 = vpop.f32.mrf.mxu0
        %v1031 = vpop.f32.mrf.mxu0
        %1032 = vmatmul.bf16.gmra.mxu0 %v540
        %v1033 = vpop.f32.mrf.mxu0
        %v1034 = vadd.f32 0.0, %v1033
        %v1035 = vpop.f32.mrf.mxu0
        %v1036 = vadd.f32 0.0, %v1035
        %1037 = vmatmul.bf16.gmra.mxu0 %v542
        %v1038 = vpop.f32.mrf.mxu0
        %v1039 = vadd.f32 0.0, %v1038
        %v1040 = vpop.f32.mrf.mxu0
        %v1041 = vadd.f32 0.0, %v1040
        %1042 = vmatmul.bf16.gmra.mxu0 %v544
        %v1043 = vpop.f32.mrf.mxu0
        %v1044 = vadd.f32 0.0, %v1043
        %v1045 = vpop.f32.mrf.mxu0
        %v1046 = vadd.f32 0.0, %v1045
        %1047 = vmatmul.bf16.gmra.mxu0 %v546
        %v1048 = vpop.f32.mrf.mxu0
        %v1049 = vadd.f32 0.0, %v1048
        %v1050 = vpop.f32.mrf.mxu0
        %v1051 = vadd.f32 0.0, %v1050
        %1052 = vmatmul.bf16.gmra.mxu0 %v548
        %v1053 = vpop.f32.mrf.mxu0
        %v1054 = vadd.f32 0.0, %v1053
        %v1055 = vpop.f32.mrf.mxu0
        %v1056 = vadd.f32 0.0, %v1055
        %1057 = vmatmul.bf16.gmra.mxu0 %v550
        %v1058 = vpop.f32.mrf.mxu0
        %v1059 = vadd.f32 0.0, %v1058
        %v1060 = vpop.f32.mrf.mxu0
        %v1061 = vadd.f32 0.0, %v1060
        %1062 = vdwg.mxu0
        %1063 = vmatpush.bf16.msra.mxu0 0
        %1064 = vmatpush.bf16.msra.mxu0 0
        %1065 = vmatpush.bf16.msra.mxu0 0
        %1066 = vmatpush.bf16.msra.mxu0 %v797
        %1067 = vmatpush.bf16.msra.mxu0 %v721
        %1068 = vmatpush.bf16.msra.mxu0 %v718
        %1069 = vmatpush.bf16.msra.mxu0 %v715
        %1070 = vmatpush.bf16.msra.mxu0 %v712
        %1071 = vmatmul.bf16.gmra.mxu0 %v763
        %v1072 = vpop.f32.mrf.mxu0
        %v1073 = vpop.f32.mrf.mxu0
        %1074 = vmatmul.bf16.gmra.mxu0 %v766
        %v1075 = vpop.f32.mrf.mxu0
        %v1076 = vpop.f32.mrf.mxu0
        %1077 = vmatmul.bf16.gmra.mxu0 %v769
        %v1078 = vpop.f32.mrf.mxu0
        %v1079 = vpop.f32.mrf.mxu0
        %1080 = vmatmul.bf16.gmra.mxu0 %v772
        %v1081 = vpop.f32.mrf.mxu0
        %v1082 = vadd.f32 %v1034, %v1081
        %v1083 = vpop.f32.mrf.mxu0
        %v1084 = vadd.f32 %v1036, %v1083
        %1085 = vmatmul.bf16.gmra.mxu0 %v775
        %v1086 = vpop.f32.mrf.mxu0
        %v1087 = vadd.f32 %v1039, %v1086
        %v1088 = vpop.f32.mrf.mxu0
        %v1089 = vadd.f32 %v1041, %v1088
        %1090 = vmatmul.bf16.gmra.mxu0 %v778
        %v1091 = vpop.f32.mrf.mxu0
        %v1092 = vadd.f32 %v1044, %v1091
        %v1093 = vpop.f32.mrf.mxu0
        %v1094 = vadd.f32 %v1046, %v1093
        %1095 = vmatmul.bf16.gmra.mxu0 %v781
        %v1096 = vpop.f32.mrf.mxu0
        %v1097 = vadd.f32 %v1049, %v1096
        %v1098 = vpop.f32.mrf.mxu0
        %v1099 = vadd.f32 %v1051, %v1098
        %1100 = vmatmul.bf16.gmra.mxu0 %v784
        %v1101 = vpop.f32.mrf.mxu0
        %v1102 = vadd.f32 %v1054, %v1101
        %v1103 = vpop.f32.mrf.mxu0
        %v1104 = vadd.f32 %v1056, %v1103
        %1105 = vmatmul.bf16.gmra.mxu0 %v787
        %v1106 = vpop.f32.mrf.mxu0
        %v1107 = vadd.f32 %v1059, %v1106
        %v1108 = vpop.f32.mrf.mxu0
        %v1109 = vadd.f32 %v1061, %v1108
        %1110 = vdwg.mxu0
        %1115 = vrot.lane.b32.xlu0 %v868, 127
        %v1116 = vpop.permute.xlu0 %1115
        %1117 = vrot.lane.b32.xlu0 %v976, 127
        %v1118 = vpop.permute.xlu0 %1117
        %1119 = vrot.lane.b32.xlu0 %v870, 127
        %v1120 = vpop.permute.xlu0 %1119
        %1121 = vrot.lane.b32.xlu0 %v978, 127
        %v1122 = vpop.permute.xlu0 %1121
        %vm1123 = vcmask 1039360
        %v1124 = vsel %vm1123, %v1116, %v1118
        %v1125 = vsel %vm1123, %v1120, %v1122
        %v1130 = vadd.f32 %v863, %v1124
        %v1131 = vadd.f32 %v971, %v1118
        %v1132 = vadd.f32 %v865, %v1125
        %v1133 = vadd.f32 %v973, %v1122
        %1138 = vrot.lane.b32.xlu0 %v873, 126
        %v1139 = vpop.permute.xlu0 %1138
        %1140 = vrot.lane.b32.xlu0 %v981, 126
        %v1141 = vpop.permute.xlu0 %1140
        %1142 = vrot.lane.b32.xlu0 %v875, 126
        %v1143 = vpop.permute.xlu0 %1142
        %1144 = vrot.lane.b32.xlu0 %v983, 126
        %v1145 = vpop.permute.xlu0 %1144
        %vm1146 = vcmask 1031168
        %v1147 = vsel %vm1146, %v1139, %v1141
        %v1148 = vsel %vm1146, %v1143, %v1145
        %v1153 = vadd.f32 %v1130, %v1147
        %v1154 = vadd.f32 %v1131, %v1141
        %v1155 = vadd.f32 %v1132, %v1148
        %v1156 = vadd.f32 %v1133, %v1145
        %1163 = vrot.lane.b32.xlu0 %v878, 111
        %v1164 = vpop.permute.xlu0 %1163
        %1165 = vrot.lane.b32.xlu0 %v986, 111
        %v1166 = vpop.permute.xlu0 %1165
        %1167 = vrot.lane.b32.xlu0 %v1082, 111
        %v1168 = vpop.permute.xlu0 %1167
        %1169 = vrot.lane.b32.xlu0 %v880, 111
        %v1170 = vpop.permute.xlu0 %1169
        %1171 = vrot.lane.b32.xlu0 %v988, 111
        %v1172 = vpop.permute.xlu0 %1171
        %1173 = vrot.lane.b32.xlu0 %v1084, 111
        %v1174 = vpop.permute.xlu0 %1173
        %vm1175 = vcmask 908288
        %v1176 = vsel %vm1175, %v1164, %v1166
        %v1177 = vsel %vm1175, %v1166, %v1168
        %v1178 = vsel %vm1175, %v1170, %v1172
        %v1179 = vsel %vm1175, %v1172, %v1174
        %v1184 = vadd.f32 %v1153, %v1176
        %v1185 = vadd.f32 %v1154, %v1177
        %v1186 = vadd.f32 %v1155, %v1178
        %v1187 = vadd.f32 %v1156, %v1179
        %1194 = vrot.lane.b32.xlu0 %v883, 110
        %v1195 = vpop.permute.xlu0 %1194
        %1196 = vrot.lane.b32.xlu0 %v991, 110
        %v1197 = vpop.permute.xlu0 %1196
        %1198 = vrot.lane.b32.xlu0 %v1087, 110
        %v1199 = vpop.permute.xlu0 %1198
        %1200 = vrot.lane.b32.xlu0 %v885, 110
        %v1201 = vpop.permute.xlu0 %1200
        %1202 = vrot.lane.b32.xlu0 %v993, 110
        %v1203 = vpop.permute.xlu0 %1202
        %1204 = vrot.lane.b32.xlu0 %v1089, 110
        %v1205 = vpop.permute.xlu0 %1204
        %vm1206 = vcmask 900096
        %v1207 = vsel %vm1206, %v1195, %v1197
        %v1208 = vsel %vm1206, %v1197, %v1199
        %v1209 = vsel %vm1206, %v1201, %v1203
        %v1210 = vsel %vm1206, %v1203, %v1205
        %v1215 = vadd.f32 %v1184, %v1207
        %v1216 = vadd.f32 %v1185, %v1208
        %v1217 = vadd.f32 %v1186, %v1209
        %v1218 = vadd.f32 %v1187, %v1210
        %1225 = vrot.lane.b32.xlu0 %v888, 109
        %v1226 = vpop.permute.xlu0 %1225
        %1227 = vrot.lane.b32.xlu0 %v996, 109
        %v1228 = vpop.permute.xlu0 %1227
        %1229 = vrot.lane.b32.xlu0 %v1092, 109
        %v1230 = vpop.permute.xlu0 %1229
        %1231 = vrot.lane.b32.xlu0 %v890, 109
        %v1232 = vpop.permute.xlu0 %1231
        %1233 = vrot.lane.b32.xlu0 %v998, 109
        %v1234 = vpop.permute.xlu0 %1233
        %1235 = vrot.lane.b32.xlu0 %v1094, 109
        %v1236 = vpop.permute.xlu0 %1235
        %vm1237 = vcmask 891904
        %v1238 = vsel %vm1237, %v1226, %v1228
        %v1239 = vsel %vm1237, %v1228, %v1230
        %v1240 = vsel %vm1237, %v1232, %v1234
        %v1241 = vsel %vm1237, %v1234, %v1236
        %v1246 = vadd.f32 %v1215, %v1238
        %v1247 = vadd.f32 %v1216, %v1239
        %v1248 = vadd.f32 %v1217, %v1240
        %v1249 = vadd.f32 %v1218, %v1241
        %1256 = vrot.lane.b32.xlu0 %v893, 94
        %v1257 = vpop.permute.xlu0 %1256
        %1258 = vrot.lane.b32.xlu0 %v1001, 94
        %v1259 = vpop.permute.xlu0 %1258
        %1260 = vrot.lane.b32.xlu0 %v1097, 94
        %v1261 = vpop.permute.xlu0 %1260
        %1262 = vrot.lane.b32.xlu0 %v895, 94
        %v1263 = vpop.permute.xlu0 %1262
        %1264 = vrot.lane.b32.xlu0 %v1003, 94
        %v1265 = vpop.permute.xlu0 %1264
        %1266 = vrot.lane.b32.xlu0 %v1099, 94
        %v1267 = vpop.permute.xlu0 %1266
        %vm1268 = vcmask 769024
        %v1269 = vsel %vm1268, %v1257, %v1259
        %v1270 = vsel %vm1268, %v1259, %v1261
        %v1271 = vsel %vm1268, %v1263, %v1265
        %v1272 = vsel %vm1268, %v1265, %v1267
        %v1277 = vadd.f32 %v1246, %v1269
        %v1278 = vadd.f32 %v1247, %v1270
        %v1279 = vadd.f32 %v1248, %v1271
        %v1280 = vadd.f32 %v1249, %v1272
        %1287 = vrot.lane.b32.xlu0 %v898, 93
        %v1288 = vpop.permute.xlu0 %1287
        %1289 = vrot.lane.b32.xlu0 %v1006, 93
        %v1290 = vpop.permute.xlu0 %1289
        %1291 = vrot.lane.b32.xlu0 %v1102, 93
        %v1292 = vpop.permute.xlu0 %1291
        %1293 = vrot.lane.b32.xlu0 %v900, 93
        %v1294 = vpop.permute.xlu0 %1293
        %1295 = vrot.lane.b32.xlu0 %v1008, 93
        %v1296 = vpop.permute.xlu0 %1295
        %1297 = vrot.lane.b32.xlu0 %v1104, 93
        %v1298 = vpop.permute.xlu0 %1297
        %vm1299 = vcmask 760832
        %v1300 = vsel %vm1299, %v1288, %v1290
        %v1301 = vsel %vm1299, %v1290, %v1292
        %v1302 = vsel %vm1299, %v1294, %v1296
        %v1303 = vsel %vm1299, %v1296, %v1298
        %v1308 = vadd.f32 %v1277, %v1300
        %v1309 = vadd.f32 %v1278, %v1301
        %v1310 = vadd.f32 %v1279, %v1302
        %v1311 = vadd.f32 %v1280, %v1303
        %1318 = vrot.lane.b32.xlu0 %v903, 92
        %v1319 = vpop.permute.xlu0 %1318
        %1320 = vrot.lane.b32.xlu0 %v1011, 92
        %v1321 = vpop.permute.xlu0 %1320
        %1322 = vrot.lane.b32.xlu0 %v1107, 92
        %v1323 = vpop.permute.xlu0 %1322
        %1324 = vrot.lane.b32.xlu0 %v905, 92
        %v1325 = vpop.permute.xlu0 %1324
        %1326 = vrot.lane.b32.xlu0 %v1013, 92
        %v1327 = vpop.permute.xlu0 %1326
        %1328 = vrot.lane.b32.xlu0 %v1109, 92
        %v1329 = vpop.permute.xlu0 %1328
        %vm1330 = vcmask 752640
        %v1331 = vsel %vm1330, %v1319, %v1321
        %v1332 = vsel %vm1330, %v1321, %v1323
        %v1333 = vsel %vm1330, %v1325, %v1327
        %v1334 = vsel %vm1330, %v1327, %v1329
        %v1339 = vadd.f32 %v1308, %v1331
        %v1340 = vadd.f32 %v1309, %v1332
        %v1341 = vadd.f32 %v1310, %v1333
        %v1342 = vadd.f32 %v1311, %v1334
        %1344 = vset.pattern.permute.xlu0 0
        %1345 = vperm.xlu0 %1344, %v295
        %v1346 = vpop.permute.xlu0 %1345
        %1349 = vset.pattern.permute.xlu0 0
        %1350 = vperm.xlu0 %1349, %v296
        %v1351 = vpop.permute.xlu0 %1350
        %v1353 = vadd.f32 %v1339, %v1346
        %v1354 = vadd.f32 %v1340, %v1346
        %v1355 = vadd.f32 %v1341, %v1351
        %v1356 = vadd.f32 %v1342, %v1351
        %1361 = vrot.lane.b32.xlu0 %v1353, 127
        %v1362 = vpop.permute.xlu0 %1361
        %1363 = vrot.lane.b32.xlu0 %v1354, 127
        %v1364 = vpop.permute.xlu0 %1363
        %1365 = vrot.lane.b32.xlu0 %v1355, 127
        %v1366 = vpop.permute.xlu0 %1365
        %1367 = vrot.lane.b32.xlu0 %v1356, 127
        %v1368 = vpop.permute.xlu0 %1367
        %v1369 = vsel %vm1123, %v1362, %v1364
        %v1370 = vsel %vm1123, %v1366, %v1368
        %v1375 = vmax.f32 %v1353, %v1369
        %v1376 = vmax.f32 %v1354, %v1364
        %v1377 = vmax.f32 %v1355, %v1370
        %v1378 = vmax.f32 %v1356, %v1368
        %1379 = vrot.lane.b32.xlu0 %v1353, 126
        %v1380 = vpop.permute.xlu0 %1379
        %1381 = vrot.lane.b32.xlu0 %v1354, 126
        %v1382 = vpop.permute.xlu0 %1381
        %1383 = vrot.lane.b32.xlu0 %v1355, 126
        %v1384 = vpop.permute.xlu0 %1383
        %1385 = vrot.lane.b32.xlu0 %v1356, 126
        %v1386 = vpop.permute.xlu0 %1385
        %v1387 = vsel %vm1146, %v1380, %v1382
        %v1388 = vsel %vm1146, %v1384, %v1386
        %v1393 = vmax.f32 %v1375, %v1387
        %v1394 = vmax.f32 %v1376, %v1382
        %v1395 = vmax.f32 %v1377, %v1388
        %v1396 = vmax.f32 %v1378, %v1386
        %1397 = vrot.lane.b32.xlu0 %v1353, 111
        %v1398 = vpop.permute.xlu0 %1397
        %1399 = vrot.lane.b32.xlu0 %v1354, 111
        %v1400 = vpop.permute.xlu0 %1399
        %1401 = vrot.lane.b32.xlu0 %v1355, 111
        %v1402 = vpop.permute.xlu0 %1401
        %1403 = vrot.lane.b32.xlu0 %v1356, 111
        %v1404 = vpop.permute.xlu0 %1403
        %v1405 = vsel %vm1175, %v1398, %v1400
        %v1406 = vsel %vm1175, %v1402, %v1404
        %v1411 = vmax.f32 %v1393, %v1405
        %v1412 = vmax.f32 %v1394, %v1400
        %v1413 = vmax.f32 %v1395, %v1406
        %v1414 = vmax.f32 %v1396, %v1404
        %1415 = vrot.lane.b32.xlu0 %v1353, 110
        %v1416 = vpop.permute.xlu0 %1415
        %1417 = vrot.lane.b32.xlu0 %v1354, 110
        %v1418 = vpop.permute.xlu0 %1417
        %1419 = vrot.lane.b32.xlu0 %v1355, 110
        %v1420 = vpop.permute.xlu0 %1419
        %1421 = vrot.lane.b32.xlu0 %v1356, 110
        %v1422 = vpop.permute.xlu0 %1421
        %v1423 = vsel %vm1206, %v1416, %v1418
        %v1424 = vsel %vm1206, %v1420, %v1422
        %v1429 = vmax.f32 %v1411, %v1423
        %v1430 = vmax.f32 %v1412, %v1418
        %v1431 = vmax.f32 %v1413, %v1424
        %v1432 = vmax.f32 %v1414, %v1422
        %1433 = vrot.lane.b32.xlu0 %v1353, 109
        %v1434 = vpop.permute.xlu0 %1433
        %1435 = vrot.lane.b32.xlu0 %v1354, 109
        %v1436 = vpop.permute.xlu0 %1435
        %1437 = vrot.lane.b32.xlu0 %v1355, 109
        %v1438 = vpop.permute.xlu0 %1437
        %1439 = vrot.lane.b32.xlu0 %v1356, 109
        %v1440 = vpop.permute.xlu0 %1439
        %v1441 = vsel %vm1237, %v1434, %v1436
        %v1442 = vsel %vm1237, %v1438, %v1440
        %v1447 = vmax.f32 %v1429, %v1441
        %v1448 = vmax.f32 %v1430, %v1436
        %v1449 = vmax.f32 %v1431, %v1442
        %v1450 = vmax.f32 %v1432, %v1440
        %1451 = vrot.lane.b32.xlu0 %v1353, 94
        %v1452 = vpop.permute.xlu0 %1451
        %1453 = vrot.lane.b32.xlu0 %v1354, 94
        %v1454 = vpop.permute.xlu0 %1453
        %1455 = vrot.lane.b32.xlu0 %v1355, 94
        %v1456 = vpop.permute.xlu0 %1455
        %1457 = vrot.lane.b32.xlu0 %v1356, 94
        %v1458 = vpop.permute.xlu0 %1457
        %v1459 = vsel %vm1268, %v1452, %v1454
        %v1460 = vsel %vm1268, %v1456, %v1458
        %v1465 = vmax.f32 %v1447, %v1459
        %v1466 = vmax.f32 %v1448, %v1454
        %v1467 = vmax.f32 %v1449, %v1460
        %v1468 = vmax.f32 %v1450, %v1458
        %1469 = vrot.lane.b32.xlu0 %v1353, 93
        %v1470 = vpop.permute.xlu0 %1469
        %1471 = vrot.lane.b32.xlu0 %v1354, 93
        %v1472 = vpop.permute.xlu0 %1471
        %1473 = vrot.lane.b32.xlu0 %v1355, 93
        %v1474 = vpop.permute.xlu0 %1473
        %1475 = vrot.lane.b32.xlu0 %v1356, 93
        %v1476 = vpop.permute.xlu0 %1475
        %v1477 = vsel %vm1299, %v1470, %v1472
        %v1478 = vsel %vm1299, %v1474, %v1476
        %v1483 = vmax.f32 %v1465, %v1477
        %v1484 = vmax.f32 %v1466, %v1472
        %v1485 = vmax.f32 %v1467, %v1478
        %v1486 = vmax.f32 %v1468, %v1476
        %1487 = vrot.lane.b32.xlu0 %v1353, 92
        %v1488 = vpop.permute.xlu0 %1487
        %1489 = vrot.lane.b32.xlu0 %v1354, 92
        %v1490 = vpop.permute.xlu0 %1489
        %1491 = vrot.lane.b32.xlu0 %v1355, 92
        %v1492 = vpop.permute.xlu0 %1491
        %1493 = vrot.lane.b32.xlu0 %v1356, 92
        %v1494 = vpop.permute.xlu0 %1493
        %v1495 = vsel %vm1330, %v1488, %v1490
        %v1496 = vsel %vm1330, %v1492, %v1494
        %v1501 = vmax.f32 %v1483, %v1495
        %v1502 = vmax.f32 %v1484, %v1490
        %v1503 = vmax.f32 %v1485, %v1496
        %v1504 = vmax.f32 %v1486, %v1494
        %v1505 = vpack.c.bf16 %v1503, %v1501
        %v1506 = vpack.c.bf16 %v1504, %v1502
        %v1535 = vunpack.c.l.b16 %v297
        %v1536 = vunpack.c.l.b16 %v298
        %v1537 = vunpack.c.l.b16 %v299
        %v1538 = vunpack.c.l.b16 %v300
        %v1539 = vunpack.c.l.b16 %v301
        %v1540 = vunpack.c.l.b16 %v302
        %v1541 = vunpack.c.l.b16 %v303
        %v1542 = vunpack.c.l.b16 %v304
        %v1543 = vunpack.c.l.b16 %v305
        %v1544 = vunpack.c.l.b16 %v306
        %v1545 = vunpack.c.l.b16 %v307
        %v1546 = vunpack.c.l.b16 %v308
        %v1547 = vunpack.c.l.b16 %v309
        %v1548 = vunpack.c.l.b16 %v310
        %v1549 = vunpack.c.l.b16 %v311
        %v1550 = vunpack.c.l.b16 %v312
        %v1551 = vunpack.c.l.b16 %v313
        %v1552 = vunpack.c.l.b16 %v314
        %v1553 = vunpack.c.l.b16 %v315
        %v1554 = vunpack.c.l.b16 %v316
        %v1555 = vunpack.c.l.b16 %v317
        %v1556 = vunpack.c.l.b16 %v318
        %v1557 = vunpack.c.l.b16 %v319
        %v1558 = vunpack.c.l.b16 %v320
        %v1559 = vunpack.c.l.b16 %v321
        %v1560 = vunpack.c.l.b16 %v322
        %v1561 = vunpack.c.l.b16 %v323
        %v1562 = vunpack.c.l.b16 %v324
        %v1563 = vpack.c.b16 %v1536, %v1535
        %v1564 = vpack.c.b16 %v1538, %v1537
        %v1565 = vpack.c.b16 %v1540, %v1539
        %v1566 = vpack.c.b16 %v1542, %v1541
        %v1567 = vpack.c.b16 %v1544, %v1543
        %v1568 = vpack.c.b16 %v1546, %v1545
        %v1569 = vpack.c.b16 %v1548, %v1547
        %v1570 = vpack.c.b16 %v1550, %v1549
        %v1571 = vpack.c.b16 %v1552, %v1551
        %v1572 = vpack.c.b16 %v1554, %v1553
        %v1573 = vpack.c.b16 %v1556, %v1555
        %v1574 = vpack.c.b16 %v1558, %v1557
        %v1575 = vpack.c.b16 %v1560, %v1559
        %v1576 = vpack.c.b16 %v1562, %v1561
        %vm1590 = vcmask 728064
        %v1592 = vsel %vm1590, %v1506, 0
        %vm1594 = vcmask 1044480
        %v1595 = vsel %vm789, 4294967295, 65535
        %v1596 = vsel %vm1594, %v1595, 0
        %v1598 = vand.u32 %v1576, %v1596
        %1600 = vmatpush.bf16.msra.mxu0 %v1570
        %1601 = vmatpush.bf16.msra.mxu0 %v1569
        %1602 = vmatpush.bf16.msra.mxu0 %v1568
        %1603 = vmatpush.bf16.msra.mxu0 %v1567
        %1604 = vmatpush.bf16.msra.mxu0 %v1566
        %1605 = vmatpush.bf16.msra.mxu0 %v1565
        %1606 = vmatpush.bf16.msra.mxu0 %v1564
        %1607 = vmatpush.bf16.msra.mxu0 %v1563
        %1608 = vmatmul.bf16.gmra.mxu0 %v1505
        %v1609 = vpop.f32.mrf.mxu0
        %v1610 = vadd.f32 0.0, %v1609
        %v1611 = vpop.f32.mrf.mxu0
        %v1612 = vadd.f32 0.0, %v1611
        %1613 = vdwg.mxu0
        %1614 = vmatpush.bf16.msra.mxu0 0
        %1615 = vmatpush.bf16.msra.mxu0 0
        %1616 = vmatpush.bf16.msra.mxu0 %v1598
        %1617 = vmatpush.bf16.msra.mxu0 %v1575
        %1618 = vmatpush.bf16.msra.mxu0 %v1574
        %1619 = vmatpush.bf16.msra.mxu0 %v1573
        %1620 = vmatpush.bf16.msra.mxu0 %v1572
        %1621 = vmatpush.bf16.msra.mxu0 %v1571
        %1622 = vmatmul.bf16.gmra.mxu0 %v1592
        %v1623 = vpop.f32.mrf.mxu0
        %v1624 = vadd.f32 %v1610, %v1623
        %v1625 = vpop.f32.mrf.mxu0
        %v1626 = vadd.f32 %v1612, %v1625
        %1627 = vdwg.mxu0
        %v1628 = vpack.c.bf16 %v1626, %v1624
        %v1729 = vunpack.c.l.b16 %v325
        %v1730 = vunpack.c.l.b16 %v326
        %v1731 = vunpack.c.l.b16 %v327
        %v1732 = vunpack.c.l.b16 %v328
        %v1733 = vunpack.c.l.b16 %v329
        %v1734 = vunpack.c.l.b16 %v330
        %v1735 = vunpack.c.l.b16 %v331
        %v1736 = vunpack.c.l.b16 %v332
        %v1737 = vunpack.c.l.b16 %v333
        %v1738 = vunpack.c.l.b16 %v334
        %v1739 = vunpack.c.l.b16 %v335
        %v1740 = vunpack.c.l.b16 %v336
        %v1741 = vunpack.c.l.b16 %v337
        %v1742 = vunpack.c.l.b16 %v338
        %v1743 = vunpack.c.l.b16 %v339
        %v1744 = vunpack.c.l.b16 %v340
        %v1745 = vunpack.c.l.b16 %v341
        %v1746 = vunpack.c.l.b16 %v342
        %v1747 = vunpack.c.l.b16 %v343
        %v1748 = vunpack.c.l.b16 %v344
        %v1749 = vunpack.c.l.b16 %v345
        %v1750 = vunpack.c.l.b16 %v346
        %v1751 = vunpack.c.l.b16 %v347
        %v1752 = vunpack.c.l.b16 %v348
        %v1753 = vunpack.c.l.b16 %v349
        %v1754 = vunpack.c.l.b16 %v350
        %v1755 = vunpack.c.l.b16 %v351
        %v1756 = vunpack.c.l.b16 %v352
        %v1757 = vunpack.c.l.b16 %v353
        %v1758 = vunpack.c.l.b16 %v354
        %v1759 = vunpack.c.l.b16 %v355
        %v1760 = vunpack.c.l.b16 %v356
        %v1761 = vunpack.c.l.b16 %v357
        %v1762 = vunpack.c.l.b16 %v358
        %v1763 = vunpack.c.l.b16 %v359
        %v1764 = vunpack.c.l.b16 %v360
        %v1765 = vunpack.c.l.b16 %v361
        %v1766 = vunpack.c.l.b16 %v362
        %v1767 = vunpack.c.l.b16 %v363
        %v1768 = vunpack.c.l.b16 %v364
        %v1769 = vunpack.c.l.b16 %v365
        %v1770 = vunpack.c.l.b16 %v366
        %v1771 = vunpack.c.l.b16 %v367
        %v1772 = vunpack.c.l.b16 %v368
        %v1773 = vunpack.c.l.b16 %v369
        %v1774 = vunpack.c.l.b16 %v370
        %v1775 = vunpack.c.l.b16 %v371
        %v1776 = vunpack.c.l.b16 %v372
        %v1777 = vunpack.c.l.b16 %v373
        %v1778 = vunpack.c.l.b16 %v374
        %v1779 = vunpack.c.l.b16 %v375
        %v1780 = vunpack.c.l.b16 %v376
        %v1781 = vunpack.c.l.b16 %v377
        %v1782 = vunpack.c.l.b16 %v378
        %v1783 = vunpack.c.l.b16 %v379
        %v1784 = vunpack.c.l.b16 %v380
        %v1785 = vunpack.c.l.b16 %v381
        %v1786 = vunpack.c.l.b16 %v382
        %v1787 = vunpack.c.l.b16 %v383
        %v1788 = vunpack.c.l.b16 %v384
        %v1789 = vunpack.c.l.b16 %v385
        %v1790 = vunpack.c.l.b16 %v386
        %v1791 = vunpack.c.l.b16 %v387
        %v1792 = vunpack.c.l.b16 %v388
        %v1793 = vunpack.c.l.b16 %v389
        %v1794 = vunpack.c.l.b16 %v390
        %v1795 = vunpack.c.l.b16 %v391
        %v1796 = vunpack.c.l.b16 %v392
        %v1797 = vunpack.c.l.b16 %v393
        %v1798 = vunpack.c.l.b16 %v394
        %v1799 = vunpack.c.l.b16 %v395
        %v1800 = vunpack.c.l.b16 %v396
        %v1801 = vunpack.c.l.b16 %v397
        %v1802 = vunpack.c.l.b16 %v398
        %v1803 = vunpack.c.l.b16 %v399
        %v1804 = vunpack.c.l.b16 %v400
        %v1805 = vunpack.c.l.b16 %v401
        %v1806 = vunpack.c.l.b16 %v402
        %v1807 = vunpack.c.l.b16 %v403
        %v1808 = vunpack.c.l.b16 %v404
        %v1809 = vunpack.c.l.b16 %v405
        %v1810 = vunpack.c.l.b16 %v406
        %v1811 = vunpack.c.l.b16 %v407
        %v1812 = vunpack.c.l.b16 %v408
        %v1813 = vunpack.c.l.b16 %v409
        %v1814 = vunpack.c.l.b16 %v410
        %v1815 = vunpack.c.l.b16 %v411
        %v1816 = vunpack.c.l.b16 %v412
        %v1817 = vunpack.c.l.b16 %v413
        %v1818 = vunpack.c.l.b16 %v414
        %v1819 = vunpack.c.l.b16 %v415
        %v1820 = vunpack.c.l.b16 %v416
        %v1821 = vunpack.c.l.b16 %v417
        %v1822 = vunpack.c.l.b16 %v418
        %v1823 = vunpack.c.l.b16 %v419
        %v1824 = vunpack.c.l.b16 %v420
        %v1825 = vunpack.c.l.b16 %v421
        %v1826 = vunpack.c.l.b16 %v422
        %v1827 = vunpack.c.l.b16 %v423
        %v1828 = vunpack.c.l.b16 %v424
        %v1829 = vpack.c.b16 %v1730, %v1729
        %v1830 = vpack.c.b16 %v1732, %v1731
        %v1831 = vpack.c.b16 %v1734, %v1733
        %v1832 = vpack.c.b16 %v1736, %v1735
        %v1833 = vpack.c.b16 %v1738, %v1737
        %v1834 = vpack.c.b16 %v1740, %v1739
        %v1835 = vpack.c.b16 %v1742, %v1741
        %v1836 = vpack.c.b16 %v1744, %v1743
        %v1837 = vpack.c.b16 %v1746, %v1745
        %v1838 = vpack.c.b16 %v1748, %v1747
        %v1839 = vpack.c.b16 %v1750, %v1749
        %v1840 = vpack.c.b16 %v1752, %v1751
        %v1841 = vpack.c.b16 %v1754, %v1753
        %v1842 = vpack.c.b16 %v1756, %v1755
        %v1843 = vpack.c.b16 %v1758, %v1757
        %v1844 = vpack.c.b16 %v1760, %v1759
        %v1845 = vpack.c.b16 %v1762, %v1761
        %v1846 = vpack.c.b16 %v1764, %v1763
        %v1847 = vpack.c.b16 %v1766, %v1765
        %v1848 = vpack.c.b16 %v1768, %v1767
        %v1849 = vpack.c.b16 %v1770, %v1769
        %v1850 = vpack.c.b16 %v1772, %v1771
        %v1851 = vpack.c.b16 %v1774, %v1773
        %v1852 = vpack.c.b16 %v1776, %v1775
        %v1853 = vpack.c.b16 %v1778, %v1777
        %v1854 = vpack.c.b16 %v1780, %v1779
        %v1855 = vpack.c.b16 %v1782, %v1781
        %v1856 = vpack.c.b16 %v1784, %v1783
        %v1857 = vpack.c.b16 %v1786, %v1785
        %v1858 = vpack.c.b16 %v1788, %v1787
        %v1859 = vpack.c.b16 %v1790, %v1789
        %v1860 = vpack.c.b16 %v1792, %v1791
        %v1861 = vpack.c.b16 %v1794, %v1793
        %v1862 = vpack.c.b16 %v1796, %v1795
        %v1863 = vpack.c.b16 %v1798, %v1797
        %v1864 = vpack.c.b16 %v1800, %v1799
        %v1865 = vpack.c.b16 %v1802, %v1801
        %v1866 = vpack.c.b16 %v1804, %v1803
        %v1867 = vpack.c.b16 %v1806, %v1805
        %v1868 = vpack.c.b16 %v1808, %v1807
        %v1869 = vpack.c.b16 %v1810, %v1809
        %v1870 = vpack.c.b16 %v1812, %v1811
        %v1871 = vpack.c.b16 %v1814, %v1813
        %v1872 = vpack.c.b16 %v1816, %v1815
        %v1873 = vpack.c.b16 %v1818, %v1817
        %v1874 = vpack.c.b16 %v1820, %v1819
        %v1875 = vpack.c.b16 %v1822, %v1821
        %v1876 = vpack.c.b16 %v1824, %v1823
        %v1877 = vpack.c.b16 %v1826, %v1825
        %v1878 = vpack.c.b16 %v1828, %v1827
        %vm1879 = vcmask 130048
        %v1881 = vsel %vm1879, %v1829, 0
        %v1884 = vsel %vm1879, %v1830, 0
        %v1887 = vsel %vm1879, %v1831, 0
        %v1890 = vsel %vm1879, %v1832, 0
        %v1893 = vsel %vm1879, %v1833, 0
        %v1896 = vsel %vm1879, %v1834, 0
        %v1899 = vsel %vm1879, %v1835, 0
        %v1902 = vsel %vm1879, %v1836, 0
        %v1905 = vsel %vm1879, %v1837, 0
        %v1908 = vsel %vm1879, %v1838, 0
        %v1911 = vsel %vm1879, %v1839, 0
        %v1914 = vsel %vm1879, %v1840, 0
        %v1917 = vsel %vm1879, %v1841, 0
        %v1920 = vsel %vm1879, %v1842, 0
        %v1923 = vsel %vm1879, %v1843, 0
        %v1926 = vsel %vm1879, %v1844, 0
        %v1929 = vsel %vm1879, %v1845, 0
        %v1932 = vsel %vm1879, %v1846, 0
        %v1935 = vsel %vm1879, %v1847, 0
        %v1938 = vsel %vm1879, %v1848, 0
        %v1941 = vsel %vm1879, %v1849, 0
        %v1944 = vsel %vm1879, %v1850, 0
        %v1947 = vsel %vm1879, %v1851, 0
        %v1950 = vsel %vm1879, %v1852, 0
        %v1953 = vsel %vm1879, %v1853, 0
        %v1956 = vsel %vm1879, %v1854, 0
        %v1959 = vsel %vm1879, %v1855, 0
        %v1962 = vsel %vm1879, %v1856, 0
        %v1965 = vsel %vm1879, %v1857, 0
        %v1968 = vsel %vm1879, %v1858, 0
        %v1971 = vsel %vm1879, %v1859, 0
        %v1974 = vsel %vm1879, %v1860, 0
        %v1977 = vsel %vm1879, %v1861, 0
        %v1980 = vsel %vm1879, %v1862, 0
        %v1983 = vsel %vm1879, %v1863, 0
        %v1986 = vsel %vm1879, %v1864, 0
        %v1989 = vsel %vm1879, %v1865, 0
        %v1992 = vsel %vm1879, %v1866, 0
        %v1995 = vsel %vm1879, %v1867, 0
        %v1998 = vsel %vm1879, %v1868, 0
        %v2001 = vsel %vm1879, %v1869, 0
        %v2004 = vsel %vm1879, %v1870, 0
        %v2007 = vsel %vm1879, %v1871, 0
        %v2010 = vsel %vm1879, %v1872, 0
        %v2013 = vsel %vm1879, %v1873, 0
        %v2016 = vsel %vm1879, %v1874, 0
        %v2019 = vsel %vm1879, %v1875, 0
        %v2022 = vsel %vm1879, %v1876, 0
        %v2025 = vsel %vm1879, %v1877, 0
        %v2028 = vsel %vm1879, %v1878, 0
        %2030 = vmatpush.bf16.msra.mxu0 0
        %2031 = vmatpush.bf16.msra.mxu0 0
        %2032 = vmatpush.bf16.msra.mxu0 0
        %2033 = vmatpush.bf16.msra.mxu0 0
        %2034 = vmatpush.bf16.msra.mxu0 0
        %2035 = vmatpush.bf16.msra.mxu0 0
        %2036 = vmatpush.bf16.msra.mxu0 0
        %2037 = vmatpush.bf16.msra.mxu0 %v1628
        %2038 = vmatmul.bf16.gmra.mxu0 %v1881
        %v2039 = vpop.f32.mrf.mxu0
        %v2040 = vadd.f32 0.0, %v2039
        %v2041 = vpop.f32.mrf.mxu0
        %v2042 = vadd.f32 0.0, %v2041
        %2043 = vmatmul.bf16.gmra.mxu0 %v1884
        %v2044 = vpop.f32.mrf.mxu0
        %v2045 = vadd.f32 0.0, %v2044
        %v2046 = vpop.f32.mrf.mxu0
        %v2047 = vadd.f32 0.0, %v2046
        %2048 = vmatmul.bf16.gmra.mxu0 %v1887
        %v2049 = vpop.f32.mrf.mxu0
        %v2050 = vadd.f32 0.0, %v2049
        %v2051 = vpop.f32.mrf.mxu0
        %v2052 = vadd.f32 0.0, %v2051
        %2053 = vmatmul.bf16.gmra.mxu0 %v1890
        %v2054 = vpop.f32.mrf.mxu0
        %v2055 = vadd.f32 0.0, %v2054
        %v2056 = vpop.f32.mrf.mxu0
        %v2057 = vadd.f32 0.0, %v2056
        %2058 = vmatmul.bf16.gmra.mxu0 %v1893
        %v2059 = vpop.f32.mrf.mxu0
        %v2060 = vadd.f32 0.0, %v2059
        %v2061 = vpop.f32.mrf.mxu0
        %v2062 = vadd.f32 0.0, %v2061
        %2063 = vmatmul.bf16.gmra.mxu0 %v1896
        %v2064 = vpop.f32.mrf.mxu0
        %v2065 = vadd.f32 0.0, %v2064
        %v2066 = vpop.f32.mrf.mxu0
        %v2067 = vadd.f32 0.0, %v2066
        %2068 = vmatmul.bf16.gmra.mxu0 %v1899
        %v2069 = vpop.f32.mrf.mxu0
        %v2070 = vadd.f32 0.0, %v2069
        %v2071 = vpop.f32.mrf.mxu0
        %v2072 = vadd.f32 0.0, %v2071
        %2073 = vmatmul.bf16.gmra.mxu0 %v1902
        %v2074 = vpop.f32.mrf.mxu0
        %v2075 = vadd.f32 0.0, %v2074
        %v2076 = vpop.f32.mrf.mxu0
        %v2077 = vadd.f32 0.0, %v2076
        %2078 = vmatmul.bf16.gmra.mxu0 %v1905
        %v2079 = vpop.f32.mrf.mxu0
        %v2080 = vadd.f32 0.0, %v2079
        %v2081 = vpop.f32.mrf.mxu0
        %v2082 = vadd.f32 0.0, %v2081
        %2083 = vmatmul.bf16.gmra.mxu0 %v1908
        %v2084 = vpop.f32.mrf.mxu0
        %v2085 = vadd.f32 0.0, %v2084
        %v2086 = vpop.f32.mrf.mxu0
        %v2087 = vadd.f32 0.0, %v2086
        %2088 = vmatmul.bf16.gmra.mxu0 %v1911
        %v2089 = vpop.f32.mrf.mxu0
        %v2090 = vadd.f32 0.0, %v2089
        %v2091 = vpop.f32.mrf.mxu0
        %v2092 = vadd.f32 0.0, %v2091
        %2093 = vmatmul.bf16.gmra.mxu0 %v1914
        %v2094 = vpop.f32.mrf.mxu0
        %v2095 = vadd.f32 0.0, %v2094
        %v2096 = vpop.f32.mrf.mxu0
        %v2097 = vadd.f32 0.0, %v2096
        %2098 = vmatmul.bf16.gmra.mxu0 %v1917
        %v2099 = vpop.f32.mrf.mxu0
        %v2100 = vadd.f32 0.0, %v2099
        %v2101 = vpop.f32.mrf.mxu0
        %v2102 = vadd.f32 0.0, %v2101
        %2103 = vmatmul.bf16.gmra.mxu0 %v1920
        %v2104 = vpop.f32.mrf.mxu0
        %v2105 = vadd.f32 0.0, %v2104
        %v2106 = vpop.f32.mrf.mxu0
        %v2107 = vadd.f32 0.0, %v2106
        %2108 = vmatmul.bf16.gmra.mxu0 %v1923
        %v2109 = vpop.f32.mrf.mxu0
        %v2110 = vadd.f32 0.0, %v2109
        %v2111 = vpop.f32.mrf.mxu0
        %v2112 = vadd.f32 0.0, %v2111
        %2113 = vmatmul.bf16.gmra.mxu0 %v1926
        %v2114 = vpop.f32.mrf.mxu0
        %v2115 = vadd.f32 0.0, %v2114
        %v2116 = vpop.f32.mrf.mxu0
        %v2117 = vadd.f32 0.0, %v2116
        %2118 = vmatmul.bf16.gmra.mxu0 %v1929
        %v2119 = vpop.f32.mrf.mxu0
        %v2120 = vadd.f32 0.0, %v2119
        %v2121 = vpop.f32.mrf.mxu0
        %v2122 = vadd.f32 0.0, %v2121
        %2123 = vmatmul.bf16.gmra.mxu0 %v1932
        %v2124 = vpop.f32.mrf.mxu0
        %v2125 = vadd.f32 0.0, %v2124
        %v2126 = vpop.f32.mrf.mxu0
        %v2127 = vadd.f32 0.0, %v2126
        %2128 = vmatmul.bf16.gmra.mxu0 %v1935
        %v2129 = vpop.f32.mrf.mxu0
        %v2130 = vadd.f32 0.0, %v2129
        %v2131 = vpop.f32.mrf.mxu0
        %v2132 = vadd.f32 0.0, %v2131
        %2133 = vmatmul.bf16.gmra.mxu0 %v1938
        %v2134 = vpop.f32.mrf.mxu0
        %v2135 = vadd.f32 0.0, %v2134
        %v2136 = vpop.f32.mrf.mxu0
        %v2137 = vadd.f32 0.0, %v2136
        %2138 = vmatmul.bf16.gmra.mxu0 %v1941
        %v2139 = vpop.f32.mrf.mxu0
        %v2140 = vadd.f32 0.0, %v2139
        %v2141 = vpop.f32.mrf.mxu0
        %v2142 = vadd.f32 0.0, %v2141
        %2143 = vmatmul.bf16.gmra.mxu0 %v1944
        %v2144 = vpop.f32.mrf.mxu0
        %v2145 = vadd.f32 0.0, %v2144
        %v2146 = vpop.f32.mrf.mxu0
        %v2147 = vadd.f32 0.0, %v2146
        %2148 = vmatmul.bf16.gmra.mxu0 %v1947
        %v2149 = vpop.f32.mrf.mxu0
        %v2150 = vadd.f32 0.0, %v2149
        %v2151 = vpop.f32.mrf.mxu0
        %v2152 = vadd.f32 0.0, %v2151
        %2153 = vmatmul.bf16.gmra.mxu0 %v1950
        %v2154 = vpop.f32.mrf.mxu0
        %v2155 = vadd.f32 0.0, %v2154
        %v2156 = vpop.f32.mrf.mxu0
        %v2157 = vadd.f32 0.0, %v2156
        %2158 = vmatmul.bf16.gmra.mxu0 %v1953
        %v2159 = vpop.f32.mrf.mxu0
        %v2160 = vadd.f32 0.0, %v2159
        %v2161 = vpop.f32.mrf.mxu0
        %v2162 = vadd.f32 0.0, %v2161
        %2163 = vmatmul.bf16.gmra.mxu0 %v1956
        %v2164 = vpop.f32.mrf.mxu0
        %v2165 = vadd.f32 0.0, %v2164
        %v2166 = vpop.f32.mrf.mxu0
        %v2167 = vadd.f32 0.0, %v2166
        %2168 = vmatmul.bf16.gmra.mxu0 %v1959
        %v2169 = vpop.f32.mrf.mxu0
        %v2170 = vadd.f32 0.0, %v2169
        %v2171 = vpop.f32.mrf.mxu0
        %v2172 = vadd.f32 0.0, %v2171
        %2173 = vmatmul.bf16.gmra.mxu0 %v1962
        %v2174 = vpop.f32.mrf.mxu0
        %v2175 = vadd.f32 0.0, %v2174
        %v2176 = vpop.f32.mrf.mxu0
        %v2177 = vadd.f32 0.0, %v2176
        %2178 = vmatmul.bf16.gmra.mxu0 %v1965
        %v2179 = vpop.f32.mrf.mxu0
        %v2180 = vadd.f32 0.0, %v2179
        %v2181 = vpop.f32.mrf.mxu0
        %v2182 = vadd.f32 0.0, %v2181
        %2183 = vmatmul.bf16.gmra.mxu0 %v1968
        %v2184 = vpop.f32.mrf.mxu0
        %v2185 = vadd.f32 0.0, %v2184
        %v2186 = vpop.f32.mrf.mxu0
        %v2187 = vadd.f32 0.0, %v2186
        %2188 = vmatmul.bf16.gmra.mxu0 %v1971
        %v2189 = vpop.f32.mrf.mxu0
        %v2190 = vadd.f32 0.0, %v2189
        %v2191 = vpop.f32.mrf.mxu0
        %v2192 = vadd.f32 0.0, %v2191
        %2193 = vmatmul.bf16.gmra.mxu0 %v1974
        %v2194 = vpop.f32.mrf.mxu0
        %v2195 = vadd.f32 0.0, %v2194
        %v2196 = vpop.f32.mrf.mxu0
        %v2197 = vadd.f32 0.0, %v2196
        %2198 = vmatmul.bf16.gmra.mxu0 %v1977
        %v2199 = vpop.f32.mrf.mxu0
        %v2200 = vadd.f32 0.0, %v2199
        %v2201 = vpop.f32.mrf.mxu0
        %v2202 = vadd.f32 0.0, %v2201
        %2203 = vmatmul.bf16.gmra.mxu0 %v1980
        %v2204 = vpop.f32.mrf.mxu0
        %v2205 = vadd.f32 0.0, %v2204
        %v2206 = vpop.f32.mrf.mxu0
        %v2207 = vadd.f32 0.0, %v2206
        %2208 = vmatmul.bf16.gmra.mxu0 %v1983
        %v2209 = vpop.f32.mrf.mxu0
        %v2210 = vadd.f32 0.0, %v2209
        %v2211 = vpop.f32.mrf.mxu0
        %v2212 = vadd.f32 0.0, %v2211
        %2213 = vmatmul.bf16.gmra.mxu0 %v1986
        %v2214 = vpop.f32.mrf.mxu0
        %v2215 = vadd.f32 0.0, %v2214
        %v2216 = vpop.f32.mrf.mxu0
        %v2217 = vadd.f32 0.0, %v2216
        %2218 = vmatmul.bf16.gmra.mxu0 %v1989
        %v2219 = vpop.f32.mrf.mxu0
        %v2220 = vadd.f32 0.0, %v2219
        %v2221 = vpop.f32.mrf.mxu0
        %v2222 = vadd.f32 0.0, %v2221
        %2223 = vmatmul.bf16.gmra.mxu0 %v1992
        %v2224 = vpop.f32.mrf.mxu0
        %v2225 = vadd.f32 0.0, %v2224
        %v2226 = vpop.f32.mrf.mxu0
        %v2227 = vadd.f32 0.0, %v2226
        %2228 = vmatmul.bf16.gmra.mxu0 %v1995
        %v2229 = vpop.f32.mrf.mxu0
        %v2230 = vadd.f32 0.0, %v2229
        %v2231 = vpop.f32.mrf.mxu0
        %v2232 = vadd.f32 0.0, %v2231
        %2233 = vmatmul.bf16.gmra.mxu0 %v1998
        %v2234 = vpop.f32.mrf.mxu0
        %v2235 = vadd.f32 0.0, %v2234
        %v2236 = vpop.f32.mrf.mxu0
        %v2237 = vadd.f32 0.0, %v2236
        %2238 = vmatmul.bf16.gmra.mxu0 %v2001
        %v2239 = vpop.f32.mrf.mxu0
        %v2240 = vadd.f32 0.0, %v2239
        %v2241 = vpop.f32.mrf.mxu0
        %v2242 = vadd.f32 0.0, %v2241
        %2243 = vmatmul.bf16.gmra.mxu0 %v2004
        %v2244 = vpop.f32.mrf.mxu0
        %v2245 = vadd.f32 0.0, %v2244
        %v2246 = vpop.f32.mrf.mxu0
        %v2247 = vadd.f32 0.0, %v2246
        %2248 = vmatmul.bf16.gmra.mxu0 %v2007
        %v2249 = vpop.f32.mrf.mxu0
        %v2250 = vadd.f32 0.0, %v2249
        %v2251 = vpop.f32.mrf.mxu0
        %v2252 = vadd.f32 0.0, %v2251
        %2253 = vmatmul.bf16.gmra.mxu0 %v2010
        %v2254 = vpop.f32.mrf.mxu0
        %v2255 = vadd.f32 0.0, %v2254
        %v2256 = vpop.f32.mrf.mxu0
        %v2257 = vadd.f32 0.0, %v2256
        %2258 = vmatmul.bf16.gmra.mxu0 %v2013
        %v2259 = vpop.f32.mrf.mxu0
        %v2260 = vadd.f32 0.0, %v2259
        %v2261 = vpop.f32.mrf.mxu0
        %v2262 = vadd.f32 0.0, %v2261
        %2263 = vmatmul.bf16.gmra.mxu0 %v2016
        %v2264 = vpop.f32.mrf.mxu0
        %v2265 = vadd.f32 0.0, %v2264
        %v2266 = vpop.f32.mrf.mxu0
        %v2267 = vadd.f32 0.0, %v2266
        %2268 = vmatmul.bf16.gmra.mxu0 %v2019
        %v2269 = vpop.f32.mrf.mxu0
        %v2270 = vadd.f32 0.0, %v2269
        %v2271 = vpop.f32.mrf.mxu0
        %v2272 = vadd.f32 0.0, %v2271
        %2273 = vmatmul.bf16.gmra.mxu0 %v2022
        %v2274 = vpop.f32.mrf.mxu0
        %v2275 = vadd.f32 0.0, %v2274
        %v2276 = vpop.f32.mrf.mxu0
        %v2277 = vadd.f32 0.0, %v2276
        %2278 = vmatmul.bf16.gmra.mxu0 %v2025
        %v2279 = vpop.f32.mrf.mxu0
        %v2280 = vadd.f32 0.0, %v2279
        %v2281 = vpop.f32.mrf.mxu0
        %v2282 = vadd.f32 0.0, %v2281
        %2283 = vmatmul.bf16.gmra.mxu0 %v2028
        %v2284 = vpop.f32.mrf.mxu0
        %v2285 = vadd.f32 0.0, %v2284
        %v2286 = vpop.f32.mrf.mxu0
        %v2287 = vadd.f32 0.0, %v2286
        %2288 = vdwg.mxu0
        %2293 = vrot.lane.b32.xlu0 %v2050, 127
        %v2294 = vpop.permute.xlu0 %2293
        %2295 = vrot.lane.b32.xlu0 %v2052, 127
        %v2296 = vpop.permute.xlu0 %2295
        %2297 = vrot.lane.b32.xlu0 %v2055, 127
        %v2298 = vpop.permute.xlu0 %2297
        %2299 = vrot.lane.b32.xlu0 %v2057, 127
        %v2300 = vpop.permute.xlu0 %2299
        %v2305 = vadd.f32 %v2040, %v2294
        %v2306 = vadd.f32 %v2042, %v2296
        %v2307 = vadd.f32 %v2045, %v2298
        %v2308 = vadd.f32 %v2047, %v2300
        %2313 = vrot.lane.b32.xlu0 %v2060, 126
        %v2314 = vpop.permute.xlu0 %2313
        %2315 = vrot.lane.b32.xlu0 %v2062, 126
        %v2316 = vpop.permute.xlu0 %2315
        %2317 = vrot.lane.b32.xlu0 %v2065, 126
        %v2318 = vpop.permute.xlu0 %2317
        %2319 = vrot.lane.b32.xlu0 %v2067, 126
        %v2320 = vpop.permute.xlu0 %2319
        %v2325 = vadd.f32 %v2305, %v2314
        %v2326 = vadd.f32 %v2306, %v2316
        %v2327 = vadd.f32 %v2307, %v2318
        %v2328 = vadd.f32 %v2308, %v2320
        %2333 = vrot.lane.b32.xlu0 %v2070, 125
        %v2334 = vpop.permute.xlu0 %2333
        %2335 = vrot.lane.b32.xlu0 %v2072, 125
        %v2336 = vpop.permute.xlu0 %2335
        %2337 = vrot.lane.b32.xlu0 %v2075, 125
        %v2338 = vpop.permute.xlu0 %2337
        %2339 = vrot.lane.b32.xlu0 %v2077, 125
        %v2340 = vpop.permute.xlu0 %2339
        %v2345 = vadd.f32 %v2325, %v2334
        %v2346 = vadd.f32 %v2326, %v2336
        %v2347 = vadd.f32 %v2327, %v2338
        %v2348 = vadd.f32 %v2328, %v2340
        %2353 = vrot.lane.b32.xlu0 %v2080, 124
        %v2354 = vpop.permute.xlu0 %2353
        %2355 = vrot.lane.b32.xlu0 %v2082, 124
        %v2356 = vpop.permute.xlu0 %2355
        %2357 = vrot.lane.b32.xlu0 %v2085, 124
        %v2358 = vpop.permute.xlu0 %2357
        %2359 = vrot.lane.b32.xlu0 %v2087, 124
        %v2360 = vpop.permute.xlu0 %2359
        %v2365 = vadd.f32 %v2345, %v2354
        %v2366 = vadd.f32 %v2346, %v2356
        %v2367 = vadd.f32 %v2347, %v2358
        %v2368 = vadd.f32 %v2348, %v2360
        %2373 = vrot.lane.b32.xlu0 %v2090, 121
        %v2374 = vpop.permute.xlu0 %2373
        %2375 = vrot.lane.b32.xlu0 %v2092, 121
        %v2376 = vpop.permute.xlu0 %2375
        %2377 = vrot.lane.b32.xlu0 %v2095, 121
        %v2378 = vpop.permute.xlu0 %2377
        %2379 = vrot.lane.b32.xlu0 %v2097, 121
        %v2380 = vpop.permute.xlu0 %2379
        %v2385 = vadd.f32 %v2365, %v2374
        %v2386 = vadd.f32 %v2366, %v2376
        %v2387 = vadd.f32 %v2367, %v2378
        %v2388 = vadd.f32 %v2368, %v2380
        %2393 = vrot.lane.b32.xlu0 %v2100, 120
        %v2394 = vpop.permute.xlu0 %2393
        %2395 = vrot.lane.b32.xlu0 %v2102, 120
        %v2396 = vpop.permute.xlu0 %2395
        %2397 = vrot.lane.b32.xlu0 %v2105, 120
        %v2398 = vpop.permute.xlu0 %2397
        %2399 = vrot.lane.b32.xlu0 %v2107, 120
        %v2400 = vpop.permute.xlu0 %2399
        %v2405 = vadd.f32 %v2385, %v2394
        %v2406 = vadd.f32 %v2386, %v2396
        %v2407 = vadd.f32 %v2387, %v2398
        %v2408 = vadd.f32 %v2388, %v2400
        %2413 = vrot.lane.b32.xlu0 %v2110, 119
        %v2414 = vpop.permute.xlu0 %2413
        %2415 = vrot.lane.b32.xlu0 %v2112, 119
        %v2416 = vpop.permute.xlu0 %2415
        %2417 = vrot.lane.b32.xlu0 %v2115, 119
        %v2418 = vpop.permute.xlu0 %2417
        %2419 = vrot.lane.b32.xlu0 %v2117, 119
        %v2420 = vpop.permute.xlu0 %2419
        %v2425 = vadd.f32 %v2405, %v2414
        %v2426 = vadd.f32 %v2406, %v2416
        %v2427 = vadd.f32 %v2407, %v2418
        %v2428 = vadd.f32 %v2408, %v2420
        %2433 = vrot.lane.b32.xlu0 %v2120, 118
        %v2434 = vpop.permute.xlu0 %2433
        %2435 = vrot.lane.b32.xlu0 %v2122, 118
        %v2436 = vpop.permute.xlu0 %2435
        %2437 = vrot.lane.b32.xlu0 %v2125, 118
        %v2438 = vpop.permute.xlu0 %2437
        %2439 = vrot.lane.b32.xlu0 %v2127, 118
        %v2440 = vpop.permute.xlu0 %2439
        %v2445 = vadd.f32 %v2425, %v2434
        %v2446 = vadd.f32 %v2426, %v2436
        %v2447 = vadd.f32 %v2427, %v2438
        %v2448 = vadd.f32 %v2428, %v2440
        %2453 = vrot.lane.b32.xlu0 %v2130, 117
        %v2454 = vpop.permute.xlu0 %2453
        %2455 = vrot.lane.b32.xlu0 %v2132, 117
        %v2456 = vpop.permute.xlu0 %2455
        %2457 = vrot.lane.b32.xlu0 %v2135, 117
        %v2458 = vpop.permute.xlu0 %2457
        %2459 = vrot.lane.b32.xlu0 %v2137, 117
        %v2460 = vpop.permute.xlu0 %2459
        %v2465 = vadd.f32 %v2445, %v2454
        %v2466 = vadd.f32 %v2446, %v2456
        %v2467 = vadd.f32 %v2447, %v2458
        %v2468 = vadd.f32 %v2448, %v2460
        %2473 = vrot.lane.b32.xlu0 %v2140, 114
        %v2474 = vpop.permute.xlu0 %2473
        %2475 = vrot.lane.b32.xlu0 %v2142, 114
        %v2476 = vpop.permute.xlu0 %2475
        %2477 = vrot.lane.b32.xlu0 %v2145, 114
        %v2478 = vpop.permute.xlu0 %2477
        %2479 = vrot.lane.b32.xlu0 %v2147, 114
        %v2480 = vpop.permute.xlu0 %2479
        %v2485 = vadd.f32 %v2465, %v2474
        %v2486 = vadd.f32 %v2466, %v2476
        %v2487 = vadd.f32 %v2467, %v2478
        %v2488 = vadd.f32 %v2468, %v2480
        %2493 = vrot.lane.b32.xlu0 %v2150, 113
        %v2494 = vpop.permute.xlu0 %2493
        %2495 = vrot.lane.b32.xlu0 %v2152, 113
        %v2496 = vpop.permute.xlu0 %2495
        %2497 = vrot.lane.b32.xlu0 %v2155, 113
        %v2498 = vpop.permute.xlu0 %2497
        %2499 = vrot.lane.b32.xlu0 %v2157, 113
        %v2500 = vpop.permute.xlu0 %2499
        %v2505 = vadd.f32 %v2485, %v2494
        %v2506 = vadd.f32 %v2486, %v2496
        %v2507 = vadd.f32 %v2487, %v2498
        %v2508 = vadd.f32 %v2488, %v2500
        %2513 = vrot.lane.b32.xlu0 %v2160, 112
        %v2514 = vpop.permute.xlu0 %2513
        %2515 = vrot.lane.b32.xlu0 %v2162, 112
        %v2516 = vpop.permute.xlu0 %2515
        %2517 = vrot.lane.b32.xlu0 %v2165, 112
        %v2518 = vpop.permute.xlu0 %2517
        %2519 = vrot.lane.b32.xlu0 %v2167, 112
        %v2520 = vpop.permute.xlu0 %2519
        %v2525 = vadd.f32 %v2505, %v2514
        %v2526 = vadd.f32 %v2506, %v2516
        %v2527 = vadd.f32 %v2507, %v2518
        %v2528 = vadd.f32 %v2508, %v2520
        %2533 = vrot.lane.b32.xlu0 %v2170, 111
        %v2534 = vpop.permute.xlu0 %2533
        %2535 = vrot.lane.b32.xlu0 %v2172, 111
        %v2536 = vpop.permute.xlu0 %2535
        %2537 = vrot.lane.b32.xlu0 %v2175, 111
        %v2538 = vpop.permute.xlu0 %2537
        %2539 = vrot.lane.b32.xlu0 %v2177, 111
        %v2540 = vpop.permute.xlu0 %2539
        %v2545 = vadd.f32 %v2525, %v2534
        %v2546 = vadd.f32 %v2526, %v2536
        %v2547 = vadd.f32 %v2527, %v2538
        %v2548 = vadd.f32 %v2528, %v2540
        %2553 = vrot.lane.b32.xlu0 %v2180, 110
        %v2554 = vpop.permute.xlu0 %2553
        %2555 = vrot.lane.b32.xlu0 %v2182, 110
        %v2556 = vpop.permute.xlu0 %2555
        %2557 = vrot.lane.b32.xlu0 %v2185, 110
        %v2558 = vpop.permute.xlu0 %2557
        %2559 = vrot.lane.b32.xlu0 %v2187, 110
        %v2560 = vpop.permute.xlu0 %2559
        %v2565 = vadd.f32 %v2545, %v2554
        %v2566 = vadd.f32 %v2546, %v2556
        %v2567 = vadd.f32 %v2547, %v2558
        %v2568 = vadd.f32 %v2548, %v2560
        %2573 = vrot.lane.b32.xlu0 %v2190, 107
        %v2574 = vpop.permute.xlu0 %2573
        %2575 = vrot.lane.b32.xlu0 %v2192, 107
        %v2576 = vpop.permute.xlu0 %2575
        %2577 = vrot.lane.b32.xlu0 %v2195, 107
        %v2578 = vpop.permute.xlu0 %2577
        %2579 = vrot.lane.b32.xlu0 %v2197, 107
        %v2580 = vpop.permute.xlu0 %2579
        %v2585 = vadd.f32 %v2565, %v2574
        %v2586 = vadd.f32 %v2566, %v2576
        %v2587 = vadd.f32 %v2567, %v2578
        %v2588 = vadd.f32 %v2568, %v2580
        %2593 = vrot.lane.b32.xlu0 %v2200, 106
        %v2594 = vpop.permute.xlu0 %2593
        %2595 = vrot.lane.b32.xlu0 %v2202, 106
        %v2596 = vpop.permute.xlu0 %2595
        %2597 = vrot.lane.b32.xlu0 %v2205, 106
        %v2598 = vpop.permute.xlu0 %2597
        %2599 = vrot.lane.b32.xlu0 %v2207, 106
        %v2600 = vpop.permute.xlu0 %2599
        %v2605 = vadd.f32 %v2585, %v2594
        %v2606 = vadd.f32 %v2586, %v2596
        %v2607 = vadd.f32 %v2587, %v2598
        %v2608 = vadd.f32 %v2588, %v2600
        %2613 = vrot.lane.b32.xlu0 %v2210, 105
        %v2614 = vpop.permute.xlu0 %2613
        %2615 = vrot.lane.b32.xlu0 %v2212, 105
        %v2616 = vpop.permute.xlu0 %2615
        %2617 = vrot.lane.b32.xlu0 %v2215, 105
        %v2618 = vpop.permute.xlu0 %2617
        %2619 = vrot.lane.b32.xlu0 %v2217, 105
        %v2620 = vpop.permute.xlu0 %2619
        %v2625 = vadd.f32 %v2605, %v2614
        %v2626 = vadd.f32 %v2606, %v2616
        %v2627 = vadd.f32 %v2607, %v2618
        %v2628 = vadd.f32 %v2608, %v2620
        %2633 = vrot.lane.b32.xlu0 %v2220, 104
        %v2634 = vpop.permute.xlu0 %2633
        %2635 = vrot.lane.b32.xlu0 %v2222, 104
        %v2636 = vpop.permute.xlu0 %2635
        %2637 = vrot.lane.b32.xlu0 %v2225, 104
        %v2638 = vpop.permute.xlu0 %2637
        %2639 = vrot.lane.b32.xlu0 %v2227, 104
        %v2640 = vpop.permute.xlu0 %2639
        %v2645 = vadd.f32 %v2625, %v2634
        %v2646 = vadd.f32 %v2626, %v2636
        %v2647 = vadd.f32 %v2627, %v2638
        %v2648 = vadd.f32 %v2628, %v2640
        %2653 = vrot.lane.b32.xlu0 %v2230, 103
        %v2654 = vpop.permute.xlu0 %2653
        %2655 = vrot.lane.b32.xlu0 %v2232, 103
        %v2656 = vpop.permute.xlu0 %2655
        %2657 = vrot.lane.b32.xlu0 %v2235, 103
        %v2658 = vpop.permute.xlu0 %2657
        %2659 = vrot.lane.b32.xlu0 %v2237, 103
        %v2660 = vpop.permute.xlu0 %2659
        %v2665 = vadd.f32 %v2645, %v2654
        %v2666 = vadd.f32 %v2646, %v2656
        %v2667 = vadd.f32 %v2647, %v2658
        %v2668 = vadd.f32 %v2648, %v2660
        %2673 = vrot.lane.b32.xlu0 %v2240, 100
        %v2674 = vpop.permute.xlu0 %2673
        %2675 = vrot.lane.b32.xlu0 %v2242, 100
        %v2676 = vpop.permute.xlu0 %2675
        %2677 = vrot.lane.b32.xlu0 %v2245, 100
        %v2678 = vpop.permute.xlu0 %2677
        %2679 = vrot.lane.b32.xlu0 %v2247, 100
        %v2680 = vpop.permute.xlu0 %2679
        %v2685 = vadd.f32 %v2665, %v2674
        %v2686 = vadd.f32 %v2666, %v2676
        %v2687 = vadd.f32 %v2667, %v2678
        %v2688 = vadd.f32 %v2668, %v2680
        %2693 = vrot.lane.b32.xlu0 %v2250, 99
        %v2694 = vpop.permute.xlu0 %2693
        %2695 = vrot.lane.b32.xlu0 %v2252, 99
        %v2696 = vpop.permute.xlu0 %2695
        %2697 = vrot.lane.b32.xlu0 %v2255, 99
        %v2698 = vpop.permute.xlu0 %2697
        %2699 = vrot.lane.b32.xlu0 %v2257, 99
        %v2700 = vpop.permute.xlu0 %2699
        %v2705 = vadd.f32 %v2685, %v2694
        %v2706 = vadd.f32 %v2686, %v2696
        %v2707 = vadd.f32 %v2687, %v2698
        %v2708 = vadd.f32 %v2688, %v2700
        %2713 = vrot.lane.b32.xlu0 %v2260, 98
        %v2714 = vpop.permute.xlu0 %2713
        %2715 = vrot.lane.b32.xlu0 %v2262, 98
        %v2716 = vpop.permute.xlu0 %2715
        %2717 = vrot.lane.b32.xlu0 %v2265, 98
        %v2718 = vpop.permute.xlu0 %2717
        %2719 = vrot.lane.b32.xlu0 %v2267, 98
        %v2720 = vpop.permute.xlu0 %2719
        %v2725 = vadd.f32 %v2705, %v2714
        %v2726 = vadd.f32 %v2706, %v2716
        %v2727 = vadd.f32 %v2707, %v2718
        %v2728 = vadd.f32 %v2708, %v2720
        %2733 = vrot.lane.b32.xlu0 %v2270, 97
        %v2734 = vpop.permute.xlu0 %2733
        %2735 = vrot.lane.b32.xlu0 %v2272, 97
        %v2736 = vpop.permute.xlu0 %2735
        %2737 = vrot.lane.b32.xlu0 %v2275, 97
        %v2738 = vpop.permute.xlu0 %2737
        %2739 = vrot.lane.b32.xlu0 %v2277, 97
        %v2740 = vpop.permute.xlu0 %2739
        %v2745 = vadd.f32 %v2725, %v2734
        %v2746 = vadd.f32 %v2726, %v2736
        %v2747 = vadd.f32 %v2727, %v2738
        %v2748 = vadd.f32 %v2728, %v2740
        %2753 = vrot.lane.b32.xlu0 %v2280, 96
        %v2754 = vpop.permute.xlu0 %2753
        %2755 = vrot.lane.b32.xlu0 %v2282, 96
        %v2756 = vpop.permute.xlu0 %2755
        %2757 = vrot.lane.b32.xlu0 %v2285, 96
        %v2758 = vpop.permute.xlu0 %2757
        %2759 = vrot.lane.b32.xlu0 %v2287, 96
        %v2760 = vpop.permute.xlu0 %2759
        %v2765 = vadd.f32 %v2745, %v2754
        %v2766 = vadd.f32 %v2746, %v2756
        %v2767 = vadd.f32 %v2747, %v2758
        %v2768 = vadd.f32 %v2748, %v2760
        %2773 = vrot.lane.b32.xlu0 %v2765, 121
        %v2774 = vpop.permute.xlu0 %2773
        %2775 = vrot.lane.b32.xlu0 %v2766, 121
        %v2776 = vpop.permute.xlu0 %2775
        %2777 = vrot.lane.b32.xlu0 %v2767, 121
        %v2778 = vpop.permute.xlu0 %2777
        %2779 = vrot.lane.b32.xlu0 %v2768, 121
        %v2780 = vpop.permute.xlu0 %2779
        %v2785 = vmax.f32 %v2765, %v2774
        %v2786 = vmax.f32 %v2766, %v2776
        %v2787 = vmax.f32 %v2767, %v2778
        %v2788 = vmax.f32 %v2768, %v2780
        %2789 = vrot.lane.b32.xlu0 %v2765, 114
        %v2790 = vpop.permute.xlu0 %2789
        %2791 = vrot.lane.b32.xlu0 %v2766, 114
        %v2792 = vpop.permute.xlu0 %2791
        %2793 = vrot.lane.b32.xlu0 %v2767, 114
        %v2794 = vpop.permute.xlu0 %2793
        %2795 = vrot.lane.b32.xlu0 %v2768, 114
        %v2796 = vpop.permute.xlu0 %2795
        %v2801 = vmax.f32 %v2785, %v2790
        %v2802 = vmax.f32 %v2786, %v2792
        %v2803 = vmax.f32 %v2787, %v2794
        %v2804 = vmax.f32 %v2788, %v2796
        %vm2805 = vcmask 23552
        %v2806 = vsel %vm2805, %v2801, -inf
        %2807 = vmax.xlane.f32.xlu0 %v2806
        %v2808 = vpop.xlane.xlu0 %2807
        %v2809 = vsel %vm2805, %v2802, -inf
        %2810 = vmax.xlane.f32.xlu0 %v2809
        %v2811 = vpop.xlane.xlu0 %2810
        %v2812 = vsel %vm2805, %v2803, -inf
        %2813 = vmax.xlane.f32.xlu0 %v2812
        %v2814 = vpop.xlane.xlu0 %2813
        %v2815 = vsel %vm2805, %v2804, -inf
        %2816 = vmax.xlane.f32.xlu0 %v2815
        %v2817 = vpop.xlane.xlu0 %2816
        %v2818 = vmul.f32 %v425, %v2808
        %v2819 = vmul.f32 %v426, %v2811
        %v2820 = vmul.f32 %v427, %v2814
        %v2821 = vmul.f32 %v428, %v2817
        %vm2822 = vcmask 15360
        %v2823 = vsel %vm2822, %v2818, 0.0
        %v2824 = vsel %vm2822, %v2819, 0.0
        %v2825 = vadd.f32 %v2823, %v2824
        %v2826 = vsel %vm2822, %v2820, 0.0
        %v2827 = vadd.f32 %v2825, %v2826
        %v2828 = vsel %vm2822, %v2821, 0.0
        %v2829 = vadd.f32 %v2827, %v2828
        %v2830 = vrot.slane %v2829, 4
        %v2831 = vadd.f32 %v2829, %v2830
        %v2832 = vrot.slane %v2831, 2
        %v2833 = vadd.f32 %v2831, %v2832
        %v2834 = vrot.slane %v2833, 1
        %v2835 = vadd.f32 %v2833, %v2834
        %v2836 = vadd.f32 %v2835, %v429
        %vm2837 = vcmask 8192
        %v2838 = vsel %vm2837, %v2836, -inf
        %2839 = vmax.xlane.f32.xlu0 %v2838
        %v2840 = vpop.xlane.xlu0 %2839
        %v2841 = vsub.f32 %v2836, %v2840
        %v2842 = vmul.f32 %v2841, 1.442695
        %v2843 = vpow.pop %v2842
        %v2844 = vsel %vm2837, %v2843, 0.0
        %2845 = vadd.xlane.f32.xlu0 %v2844
        %v2846 = vpop.xlane.xlu0 %2845
        %v2847 = vrcp.pop %v2846
        %v2848 = vmul.f32 %v2846, %v2847
        %v2849 = vsub.f32 1.0, %v2848
        %v2850 = vmul.f32 %v2847, %v2849
        %v2851 = vadd.f32 %v2847, %v2850
        %vm2852 = vweird.f32 %v2846
        %vm2853 = vweird.f32 %v2847
        %vm2854 = vmor %vm2852, %vm2853
        %v2855 = vsel %vm2854, %v2847, %v2851
        %v2856 = vand.u32 2147483647, %v2846
        %vm2857 = vcmp.eq.f32.partialorder %v2856, 8.507059e+37
        %v2858 = vand.u32 %v2846, 2147483648
        %v2859 = vor.u32 1.1754944e-38, %v2858
        %v2860 = vsel %vm2857, %v2859, %v2855
        %v2861 = vmul.f32 %v2843, %v2860
        %2862 = vst.msk [vmem:[%s270] sm:$0x1] %vm2837, %v2861
        %s2863 = sand.u32 %s181, 1
        %s2864 = scalar_lea.sflag [#allocation3], %s2863
        %s2865 = sand.u32 %s181, 1
        %s2866 = scalar_lea.vmem [#allocation2], %s2865
        // Predicated region
        $region49: #{sparsenet_forward.1} parent=47 // pred_check
          %p2867 = pneg %p191
        $region50: #{sparsenet_forward.1} parent=47 // pred_check_branch
          %2869 = sbr.rel (%p2867) target = $region52
        $region51: #{sparsenet_forward.1} parent=47 // pred_region
          %2871 = vsyncadd %s2864, 0
          %s2872 = scalar_lea.hbm %s7, %s21
          %s2874 = sshll.u32 %s2866, 4
          %s2875 = int_to_ptr.vmem [resolvable:$true] %s2874
          %s2876 = sshll.u32 %s2872, 4
          %s2877 = int_to_ptr.hbm [resolvable:$true] %s2876
          %2879 = dma.vmem_to_hbm [thread:$0]  %s2875, 16, %s2877, %s2864
        $region52: #{sparsenet_forward.1} parent=47 // pred_fallthru
          _
      $region48: #{sparsenet_forward.1} parent=5 // pred_fallthru
        _
      %p2880 = scmp.le.s32.totalorder 2, %s16
      // Predicated region
      $region53: #{sparsenet_forward.1} parent=5 // pred_check
        %p2881 = pneg %p2880
      $region54: #{sparsenet_forward.1} parent=5 // pred_check_branch
        %2883 = sbr.rel (%p2881) target = $region56
      $region55: #{sparsenet_forward.1} parent=5 // pred_region
        %s2884 = ssub.s32 %s16, 2
        // Predicated region
        $region57: #{sparsenet_forward.1} parent=55 // pred_check
          %p2885 = pneg %p197
        $region58: #{sparsenet_forward.1} parent=55 // pred_check_branch
          %2887 = sbr.rel (%p2885) target = $region60
        $region59: #{sparsenet_forward.1} parent=55 // pred_region
          %s2888 = sand.u32 %s182, 1
          %s2889 = scalar_lea.sflag [#allocation3], %s2888
          %s2890 = sand.u32 %s182, 1
          %s2891 = scalar_lea.vmem [#allocation2], %s2890
          %2893 = dma.done %s2889, 16
        $region60: #{sparsenet_forward.1} parent=55 // pred_fallthru
          _
      $region56: #{sparsenet_forward.1} parent=5 // pred_fallthru
        _
    $region6: #{sparsenet_forward.1} parent=1 // loop_footer
      %s20 = sadd.s32 1, %s16
    $region7: #{sparsenet_forward.1} parent=1 // loop_footer_branch
      %15 = sbr.rel target = $region3
    $region8: #{sparsenet_forward.1} parent=1 // loop_exit
      _
    %2894 = vsyncpa [#allocation3], 1
    %s2895 = scalar_lea.sflag [#allocation3], 1
    %2896 = vsyncpa %s2895, 1

</llo_original>
